<compile_context>
chip_gen: v6e
topology: v6e:2x2x1
jax: 0.10.0
libtpu: 0.0.40
codegen_flags: <defaults>
</compile_context>

<pallas_src>
import functools

import jax
import jax.numpy as jnp
from jax import lax
from jax.experimental import pallas as pl
from jax.experimental.pallas import tpu as pltpu
import numpy as np


def _round_up(v, m):
    return (v + m - 1) // m * m


def _physical_vmem_bytes():
    """Physical VMEM per core; conservative (v7x-sized) if unknown."""
    try:
        return int(pltpu.get_tpu_info().vmem_capacity_bytes)
    except Exception:
        return 64 * 2**20


def _vmem_estimate(tile_t, c, kp, dist_bytes=4):
    """Rough per-kernel VMEM footprint (bytes) for one (C, tile_t) pixel tile."""
    f32 = 4
    io = 2 * 2 * c * tile_t * f32 + 2 * tile_t * 4            # x + q (double buffered) + idx
    codebook = 2 * (kp * c * (dist_bytes + f32) + kp * f32)   # -2E, E^T, e2 (worst case x2)
    partials = 2 * (c + kp) * f32
    # temporaries live in the body: x cast, score, codes iota, onehot, quant, diff
    temps = tile_t * (c * dist_bytes + 2 * kp * f32 + kp * 4 + 3 * c * f32)
    return io + codebook + partials + temps


def _select_tile_hw(hw, c, kp, batch, max_tile, vmem_budget, dist_bytes,
                    min_steps=4):
    """Largest 128-multiple pixel tile within budget with >= min_steps grid steps."""
    limit = max(128, min(_round_up(max_tile, 128), _round_up(hw, 128)))
    t = 128
    while 2 * t <= limit and _vmem_estimate(2 * t, c, kp, dist_bytes) <= vmem_budget:
        t *= 2
    # Keep >= min_steps total grid steps so both v7x TensorCores get work and
    # the input/output pipeline has something to overlap with.
    while t > 128 and batch * ((hw + t - 1) // t) < min_steps:
        t //= 2
    return t


def _vq_kernel(x_ref, nemb2_ref, embt_ref, e2_ref,
               q_ref, idx_ref, sse_ref, cnt_ref,
               *, hw_valid, mask_cols):
    """One (C, T) pixel tile, NCHW orientation.

    x_ref     : (1, C, T)    f32      input pixels (T along H*W, lane axis)
    nemb2_ref : (Kp, C)      f32/bf16 -2 * codebook (distance-matmul operand)
    embt_ref  : (C, Kp)      f32      codebook transposed (quantize gather)
    e2_ref    : (Kp, 1)      f32      ||e||^2 per code (padded codes hold 1e30)
    q_ref     : (1, C, T)    f32      quantized pixels (out, NCHW orientation)
    idx_ref   : (1, 1, T)    i32      argmin code index per pixel (out, lane-dense)
    sse_ref   : (1, 1, C, 1) f32      per-tile sum-squared-error partial (out)
    cnt_ref   : (1, 1, Kp,1) f32      per-tile per-code usage counts (out)
    """
    x = x_ref[0]                      # (C, T) f32
    nemb2 = nemb2_ref[...]            # (Kp, C)
    embt = embt_ref[...]              # (C, Kp) f32
    e2 = e2_ref[...]                  # (Kp, 1) f32

    C, T = x.shape
    Kp = nemb2.shape[0]

    # Squared L2 distances up to the per-pixel constant ||x||^2 (which cannot
    # affect the argmin):  score[k, t] = ||e_k||^2 - 2 e_k . x_t.
    # The -2 is folded into the codebook operand in the wrapper; the distance
    # matmul may run in bf16 while e2 and the gather stay f32.
    xd = x.astype(nemb2.dtype)
    score = lax.dot_general(nemb2, xd, (((1,), (0,)), ((), ())),
                            preferred_element_type=jnp.float32) + e2     # (Kp, T)

    # First-minimum argmin over the (small, sublane-axis) codebook dimension.
    smin = jnp.min(score, axis=0, keepdims=True)                         # (1, T)
    codes = lax.broadcasted_iota(jnp.int32, (Kp, T), 0)                  # (Kp, T)
    idx = jnp.min(jnp.where(score <= smin, codes, Kp), axis=0)           # (T,) i32

    # One-hot encodings and codebook gather via matmul (same as the PyTorch
    # scatter_ + matmul path), all in the NCHW orientation.
    onehot = (codes == idx[None, :]).astype(jnp.float32)                 # (Kp, T)
    quant = lax.dot_general(embt, onehot, (((1,), (0,)), ((), ())),
                            preferred_element_type=jnp.float32)          # (C, T)

    q_ref[...] = quant[None]
    idx_ref[...] = idx[None, None, :]

    diff = quant - x
    if mask_cols:
        # Last H*W tile may contain zero-padded pixels: drop them from the
        # loss / perplexity partials.
        col = pl.program_id(1) * T + lax.broadcasted_iota(jnp.int32, (1, T), 1)
        valid = (col < hw_valid).astype(jnp.float32)                     # (1, T)
        diff = diff * valid
        cnt_src = onehot * valid
    else:
        cnt_src = onehot

    # Tiny per-tile partials (lane reductions only); the scalar collapse
    # happens in the wrapper.
    sse_ref[...] = jnp.sum(diff * diff, axis=1, keepdims=True)[None, None]
    cnt_ref[...] = jnp.sum(cnt_src, axis=1, keepdims=True)[None, None]


def vector_quantizer_forward(x_nchw, embeddings, commitment_cost=0.25,
                             return_indices=False, max_tile_hw=4096,
                             distance_dtype=jnp.float32):
    """Forward pass of VectorQuantizer on NCHW inputs.

    Returns (quantized_NCHW, loss, perplexity[, indices]).
    """
    B, C, H, W = x_nchw.shape
    K, D = embeddings.shape
    assert C == D, "channel dim must equal embedding_dim"
    HW = H * W

    # NCHW consumed directly: (B, C, H, W) -> (B, C, H*W) is a free reshape.
    x3 = jnp.reshape(x_nchw, (B, C, HW)).astype(jnp.float32)

    # Codebook: K only needs sublane rounding (8) since it sits on the sublane
    # axis; padded codes get e2 = 1e30 so the argmin can never select them.
    dist_dtype = jnp.dtype(distance_dtype)
    dist_bytes = dist_dtype.itemsize
    Kp = _round_up(K, 8)
    emb = embeddings.astype(jnp.float32)
    emb_p = jnp.pad(emb, ((0, Kp - K), (0, 0)))                          # (Kp, C)
    e2 = jnp.sum(emb_p * emb_p, axis=1)
    e2 = jnp.where(jnp.arange(Kp) < K, e2, jnp.float32(1e30))[:, None]   # (Kp, 1)
    nemb2 = (-2.0 * emb_p).astype(dist_dtype)                            # (Kp, C)
    embt = emb_p.T                                                       # (C, Kp) tiny

    # Generation-aware VMEM budgeting.
    phys_vmem = _physical_vmem_bytes()
    if phys_vmem >= 96 * 2**20:          # v5e / v6e (128 MiB physical)
        tile_budget, vmem_cap = 64 * 2**20, 100 * 2**20
    else:                                 # v7x-class (64 MiB) or unknown
        tile_budget, vmem_cap = 24 * 2**20, 52 * 2**20

    T = _select_tile_hw(HW, C, Kp, B, max_tile_hw, tile_budget, dist_bytes)
    num_t = (HW + T - 1) // T
    HWp = num_t * T
    mask_cols = HWp != HW
    if mask_cols:
        x3 = jnp.pad(x3, ((0, 0), (0, 0), (0, HWp - HW)))

    est = _vmem_estimate(T, C, Kp, dist_bytes)
    vmem_limit = int(min(vmem_cap, max(32 * 2**20, 2 * est + 8 * 2**20)))

    kernel = functools.partial(_vq_kernel, hw_valid=HW, mask_cols=mask_cols)

    out_shape = (
        jax.ShapeDtypeStruct((B, C, HWp), jnp.float32),        # quantized (NCHW)
        jax.ShapeDtypeStruct((B, 1, HWp), jnp.int32),          # indices
        jax.ShapeDtypeStruct((B, num_t, C, 1), jnp.float32),   # sse partials
        jax.ShapeDtypeStruct((B, num_t, Kp, 1), jnp.float32),  # count partials
    )
    out_specs = (
        pl.BlockSpec((1, C, T), lambda b, t: (b, 0, t)),
        pl.BlockSpec((1, 1, T), lambda b, t: (b, 0, t)),
        pl.BlockSpec((1, 1, C, 1), lambda b, t: (b, t, 0, 0)),
        pl.BlockSpec((1, 1, Kp, 1), lambda b, t: (b, t, 0, 0)),
    )

    def build(single_buffer_codebook):
        cb_kw = ({"pipeline_mode": pl.Buffered(1)}
                 if single_buffer_codebook else {})
        in_specs = [
            pl.BlockSpec((1, C, T), lambda b, t: (b, 0, t)),
            pl.BlockSpec((Kp, C), lambda b, t: (0, 0), **cb_kw),
            pl.BlockSpec((C, Kp), lambda b, t: (0, 0), **cb_kw),
            pl.BlockSpec((Kp, 1), lambda b, t: (0, 0), **cb_kw),
        ]
        return pl.pallas_call(
            kernel,
            out_shape=out_shape,
            grid=(B, num_t),
            in_specs=in_specs,
            out_specs=out_specs,
            compiler_params=pltpu.CompilerParams(
                dimension_semantics=("parallel", "parallel"),
                vmem_limit_bytes=vmem_limit,
            ),
        )

    try:
        # Constant-index codebook blocks are single-buffered: no second buffer
        # for blocks that never change; the freed VMEM goes into pixel tiles.
        q_p, idx_p, sse_parts, cnt_parts = build(True)(x3, nemb2, embt, e2)
    except Exception:
        # Fallback for jax versions where pipeline_mode=pl.Buffered(1) is not
        # supported by the TPU pallas_call pipeliner.
        q_p, idx_p, sse_parts, cnt_parts = build(False)(x3, nemb2, embt, e2)

    # Loss / perplexity from the per-tile partials.
    N = B * HW
    sse = jnp.sum(sse_parts)
    mse = sse / jnp.float32(N * D)
    # Forward value: q_latent_loss == e_latent_loss numerically (detach only
    # affects gradients), so loss = (1 + commitment_cost) * mse.
    loss = (1.0 + commitment_cost) * mse
    cnt = jnp.sum(cnt_parts, axis=(0, 1, 3))[:K]
    avg_probs = cnt / jnp.float32(N)
    perplexity = jnp.exp(-jnp.sum(avg_probs * jnp.log(avg_probs + 1e-10)))

    # quantized = inputs + (quantized - inputs).detach() -> forward value is
    # the quantized rows; strip the H*W padding and restore (B, C, H, W).
    quantized = jnp.reshape(q_p[:, :, :HW], (B, C, H, W))

    if return_indices:
        indices = jnp.reshape(idx_p[:, 0, :HW], (B, H, W))
        return quantized, loss, perplexity, indices
    return quantized, loss, perplexity


def _reference_forward(x_nchw, embeddings, commitment_cost=0.25):
    """Pure-JAX reference reproducing the PyTorch forward values."""
    B, C, H, W = x_nchw.shape
    x_nhwc = jnp.transpose(x_nchw, (0, 2, 3, 1))
    flat = jnp.reshape(x_nhwc, (-1, C))
    dist = jnp.sum((flat[:, None, :] - embeddings[None, :, :]) ** 2, axis=-1)
    idx = jnp.argmin(dist, axis=1)
    quant = embeddings[idx]
    mse = jnp.mean((quant - flat) ** 2)
    loss = (1.0 + commitment_cost) * mse
    onehot = jax.nn.one_hot(idx, embeddings.shape[0], dtype=jnp.float32)
    avg_probs = jnp.mean(onehot, axis=0)
    perplexity = jnp.exp(-jnp.sum(avg_probs * jnp.log(avg_probs + 1e-10)))
    q_nchw = jnp.transpose(jnp.reshape(quant, (B, H, W, C)), (0, 3, 1, 2))
    return q_nchw, loss, perplexity, jnp.reshape(idx, (B, H, W))


if __name__ == "__main__":
    key = jax.random.PRNGKey(0)
    k_x, k_emb = jax.random.split(key)

    # Small shapes consistent with the module: NCHW input, channels == embedding_dim.
    B, C, H, W = 2, 8, 16, 16
    num_embeddings = 16

    x = jax.random.normal(k_x, (B, C, H, W), dtype=jnp.float32)
    # nn.init.uniform_(embeddings.weight, -1.0, 1.0), deterministic via PRNGKey.
    embeddings = jax.random.uniform(k_emb, (num_embeddings, C),
                                    dtype=jnp.float32, minval=-1.0, maxval=1.0)

    quantized, loss, perplexity, indices = vector_quantizer_forward(
        x, embeddings, commitment_cost=0.25, return_indices=True)
    jax.block_until_ready((quantized, loss, perplexity, indices))

    # Sanity check against a pure-JAX reference (f32 distance path).
    q_ref, loss_ref, perp_ref, idx_ref = _reference_forward(x, embeddings)
    np.testing.assert_allclose(np.asarray(quantized), np.asarray(q_ref),
                               rtol=1e-5, atol=1e-5)
    np.testing.assert_allclose(np.asarray(loss), np.asarray(loss_ref),
                               rtol=1e-5, atol=1e-6)
    np.testing.assert_allclose(np.asarray(perplexity), np.asarray(perp_ref),
                               rtol=1e-5, atol=1e-5)
    np.testing.assert_array_equal(np.asarray(indices), np.asarray(idx_ref))

    # bf16 distance-matmul fast path (v6e/v7x): near-tie argmins may differ
    # from the f32 reference, so only aggregate statistics are checked.
    q_bf, loss_bf, perp_bf = vector_quantizer_forward(
        x, embeddings, commitment_cost=0.25, distance_dtype=jnp.bfloat16)
    jax.block_until_ready((q_bf, loss_bf, perp_bf))
    assert q_bf.shape == q_ref.shape
    np.testing.assert_allclose(np.asarray(loss_bf), np.asarray(loss_ref),
                               rtol=5e-3, atol=1e-4)
    np.testing.assert_allclose(np.asarray(perp_bf), np.asarray(perp_ref),
                               rtol=5e-2, atol=5e-2)

    print("KERNEL_OK")
</pallas_src>

<mosaic_0001>
module attributes {stable_mosaic.version = 11 : i64} {
  func.func @_vq_kernel(%arg0: i32, %arg1: i32, %arg2: memref<1x8x128xf32, #tpu.memory_space<vmem>>, %arg3: memref<16x8xf32, #tpu.memory_space<vmem>>, %arg4: memref<8x16xf32, #tpu.memory_space<vmem>>, %arg5: memref<16x1xf32, #tpu.memory_space<vmem>>, %arg6: memref<1x8x128xf32, #tpu.memory_space<vmem>>, %arg7: memref<1x1x128xi32, #tpu.memory_space<vmem>>, %arg8: memref<1x1x8x1xf32, #tpu.memory_space<vmem>>, %arg9: memref<1x1x16x1xf32, #tpu.memory_space<vmem>>) attributes {dimension_semantics = [#tpu.dimension_semantics<parallel>, #tpu.dimension_semantics<parallel>], iteration_bounds = array<i64: 2, 2>, scalar_prefetch = 0 : i64, scratch_operands = 0 : i64, tpu.core_type = #tpu.core_type<tc>, window_params = [{transform_indices = @transform_0, window_bounds = array<i64: 1, 8, 128>}, {pipeline_mode = #tpu.pipeline_mode<synchronous>, transform_indices = @transform_1, window_bounds = array<i64: 16, 8>}, {pipeline_mode = #tpu.pipeline_mode<synchronous>, transform_indices = @transform_2, window_bounds = array<i64: 8, 16>}, {pipeline_mode = #tpu.pipeline_mode<synchronous>, transform_indices = @transform_3, window_bounds = array<i64: 16, 1>}, {transform_indices = @transform_4, window_bounds = array<i64: 1, 8, 128>}, {transform_indices = @transform_5, window_bounds = array<i64: 1, 1, 128>}, {transform_indices = @transform_6, window_bounds = array<i64: 1, 1, 8, 1>}, {transform_indices = @transform_7, window_bounds = array<i64: 1, 1, 16, 1>}]} {
    %c0 = arith.constant 0 : index
    %c0_0 = arith.constant 0 : index
    %c0_1 = arith.constant 0 : index
    %0 = vector.load %arg2[%c0, %c0_0, %c0_1] : memref<1x8x128xf32, #tpu.memory_space<vmem>>, vector<1x8x128xf32>
    %1 = vector.shape_cast %0 : vector<1x8x128xf32> to vector<8x128xf32>
    %c0_2 = arith.constant 0 : index
    %c0_3 = arith.constant 0 : index
    %2 = vector.load %arg3[%c0_2, %c0_3] : memref<16x8xf32, #tpu.memory_space<vmem>>, vector<16x8xf32>
    %c0_4 = arith.constant 0 : index
    %c0_5 = arith.constant 0 : index
    %3 = vector.load %arg4[%c0_4, %c0_5] : memref<8x16xf32, #tpu.memory_space<vmem>>, vector<8x16xf32>
    %c0_6 = arith.constant 0 : index
    %c0_7 = arith.constant 0 : index
    %4 = vector.load %arg5[%c0_6, %c0_7] : memref<16x1xf32, #tpu.memory_space<vmem>>, vector<16x1xf32>
    %cst = arith.constant dense<0.000000e+00> : vector<16x128xf32>
    %5 = tpu.matmul %2, %1, %cst {dimension_numbers = #tpu.dot_dimension_numbers<[1], [0], [0], [1], [0, 0, 1, 1], [], []>} : vector<16x8xf32>, vector<8x128xf32>, vector<16x128xf32> -> vector<16x128xf32>
    %6 = vector.broadcast %4 : vector<16x1xf32> to vector<16x128xf32>
    %7 = arith.addf %5, %6 : vector<16x128xf32>
    %cst_8 = arith.constant dense<0x7F800000> : vector<128xf32>
    %8 = vector.multi_reduction <minimumf>, %7, %cst_8 [0] : vector<16x128xf32> to vector<128xf32>
    %9 = vector.shape_cast %8 : vector<128xf32> to vector<1x128xf32>
    %10 = tpu.iota {dimensions = array<i32: 0>} : vector<16x128xi32>
    %11 = vector.broadcast %9 : vector<1x128xf32> to vector<16x128xf32>
    %12 = arith.cmpf ole, %7, %11 : vector<16x128xf32>
    %c16_i32 = arith.constant 16 : i32
    %13 = vector.broadcast %c16_i32 : i32 to vector<16x128xi32>
    %14 = arith.select %12, %10, %13 : vector<16x128xi1>, vector<16x128xi32>
    %cst_9 = arith.constant dense<2147483647> : vector<128xi32>
    %15 = vector.multi_reduction <minsi>, %14, %cst_9 [0] : vector<16x128xi32> to vector<128xi32>
    %16 = vector.shape_cast %15 : vector<128xi32> to vector<1x128xi32>
    %17 = vector.broadcast %16 : vector<1x128xi32> to vector<16x128xi32>
    %18 = arith.cmpi eq, %10, %17 : vector<16x128xi32>
    %19 = arith.extui %18 : vector<16x128xi1> to vector<16x128xi32>
    %20 = arith.sitofp %19 : vector<16x128xi32> to vector<16x128xf32>
    %cst_10 = arith.constant dense<0.000000e+00> : vector<8x128xf32>
    %21 = tpu.matmul %3, %20, %cst_10 {dimension_numbers = #tpu.dot_dimension_numbers<[1], [0], [0], [1], [0, 0, 1, 1], [], []>} : vector<8x16xf32>, vector<16x128xf32>, vector<8x128xf32> -> vector<8x128xf32>
    %22 = vector.shape_cast %21 : vector<8x128xf32> to vector<1x8x128xf32>
    %c0_11 = arith.constant 0 : index
    %c0_12 = arith.constant 0 : index
    %c0_13 = arith.constant 0 : index
    %23 = vector.load %arg6[%c0_11, %c0_12, %c0_13] : memref<1x8x128xf32, #tpu.memory_space<vmem>>, vector<1x8x128xf32>
    tpu.vector_store %arg6[%c0_11, %c0_12, %c0_13], %22 {strides = array<i32>} : memref<1x8x128xf32, #tpu.memory_space<vmem>>, vector<1x8x128xf32>,
    %24 = vector.shape_cast %15 : vector<128xi32> to vector<1x1x128xi32>
    %c0_14 = arith.constant 0 : index
    %c0_15 = arith.constant 0 : index
    %c0_16 = arith.constant 0 : index
    %25 = vector.load %arg7[%c0_14, %c0_15, %c0_16] : memref<1x1x128xi32, #tpu.memory_space<vmem>>, vector<1x1x128xi32>
    tpu.vector_store %arg7[%c0_14, %c0_15, %c0_16], %24 {strides = array<i32>} : memref<1x1x128xi32, #tpu.memory_space<vmem>>, vector<1x1x128xi32>,
    %26 = arith.subf %21, %1 : vector<8x128xf32>
    %27 = arith.mulf %26, %26 : vector<8x128xf32>
    %cst_17 = arith.constant dense<0.000000e+00> : vector<8xf32>
    %28 = vector.multi_reduction <add>, %27, %cst_17 [1] : vector<8x128xf32> to vector<8xf32>
    %29 = vector.shape_cast %28 : vector<8xf32> to vector<8x1xf32>
    %30 = vector.shape_cast %29 : vector<8x1xf32> to vector<1x1x8x1xf32>
    %c0_18 = arith.constant 0 : index
    %c0_19 = arith.constant 0 : index
    %c0_20 = arith.constant 0 : index
    %c0_21 = arith.constant 0 : index
    %31 = vector.load %arg8[%c0_18, %c0_19, %c0_20, %c0_21] : memref<1x1x8x1xf32, #tpu.memory_space<vmem>>, vector<1x1x8x1xf32>
    tpu.vector_store %arg8[%c0_18, %c0_19, %c0_20, %c0_21], %30 {strides = array<i32>} : memref<1x1x8x1xf32, #tpu.memory_space<vmem>>, vector<1x1x8x1xf32>,
    %cst_22 = arith.constant dense<0.000000e+00> : vector<16xf32>
    %32 = vector.multi_reduction <add>, %20, %cst_22 [1] : vector<16x128xf32> to vector<16xf32>
    %33 = vector.shape_cast %32 : vector<16xf32> to vector<16x1xf32>
    %34 = vector.shape_cast %33 : vector<16x1xf32> to vector<1x1x16x1xf32>
    %c0_23 = arith.constant 0 : index
    %c0_24 = arith.constant 0 : index
    %c0_25 = arith.constant 0 : index
    %c0_26 = arith.constant 0 : index
    %35 = vector.load %arg9[%c0_23, %c0_24, %c0_25, %c0_26] : memref<1x1x16x1xf32, #tpu.memory_space<vmem>>, vector<1x1x16x1xf32>
    tpu.vector_store %arg9[%c0_23, %c0_24, %c0_25, %c0_26], %34 {strides = array<i32>} : memref<1x1x16x1xf32, #tpu.memory_space<vmem>>, vector<1x1x16x1xf32>,
    return
  }
  func.func @transform_0(%arg0: i32, %arg1: i32) -> (i32, i32, i32) {
    %c0_i32 = arith.constant 0 : i32
    %c0_i32_0 = arith.constant 0 : i32
    return %arg0, %c0_i32, %arg1 : i32, i32, i32
  }
  func.func @transform_1(%arg0: i32, %arg1: i32) -> (i32, i32) {
    %c0_i32 = arith.constant 0 : i32
    %c0_i32_0 = arith.constant 0 : i32
    %c0_i32_1 = arith.constant 0 : i32
    return %c0_i32, %c0_i32_0 : i32, i32
  }
  func.func @transform_2(%arg0: i32, %arg1: i32) -> (i32, i32) {
    %c0_i32 = arith.constant 0 : i32
    %c0_i32_0 = arith.constant 0 : i32
    %c0_i32_1 = arith.constant 0 : i32
    return %c0_i32, %c0_i32_0 : i32, i32
  }
  func.func @transform_3(%arg0: i32, %arg1: i32) -> (i32, i32) {
    %c0_i32 = arith.constant 0 : i32
    %c0_i32_0 = arith.constant 0 : i32
    %c0_i32_1 = arith.constant 0 : i32
    return %c0_i32, %c0_i32_0 : i32, i32
  }
  func.func @transform_4(%arg0: i32, %arg1: i32) -> (i32, i32, i32) {
    %c0_i32 = arith.constant 0 : i32
    %c0_i32_0 = arith.constant 0 : i32
    return %arg0, %c0_i32, %arg1 : i32, i32, i32
  }
  func.func @transform_5(%arg0: i32, %arg1: i32) -> (i32, i32, i32) {
    %c0_i32 = arith.constant 0 : i32
    %c0_i32_0 = arith.constant 0 : i32
    return %arg0, %c0_i32, %arg1 : i32, i32, i32
  }
  func.func @transform_6(%arg0: i32, %arg1: i32) -> (i32, i32, i32, i32) {
    %c0_i32 = arith.constant 0 : i32
    %c0_i32_0 = arith.constant 0 : i32
    %c0_i32_1 = arith.constant 0 : i32
    return %arg0, %arg1, %c0_i32, %c0_i32_0 : i32, i32, i32, i32
  }
  func.func @transform_7(%arg0: i32, %arg1: i32) -> (i32, i32, i32, i32) {
    %c0_i32 = arith.constant 0 : i32
    %c0_i32_0 = arith.constant 0 : i32
    %c0_i32_1 = arith.constant 0 : i32
    return %arg0, %arg1, %c0_i32, %c0_i32_0 : i32, i32, i32, i32
  }
}

module attributes {stable_mosaic.version = 11 : i64} {
  func.func @_vq_kernel(%arg0: i32, %arg1: i32, %arg2: memref<1x8x128xf32, #tpu.memory_space<vmem>>, %arg3: memref<16x8xf32, #tpu.memory_space<vmem>>, %arg4: memref<8x16xf32, #tpu.memory_space<vmem>>, %arg5: memref<16x1xf32, #tpu.memory_space<vmem>>, %arg6: memref<1x8x128xf32, #tpu.memory_space<vmem>>, %arg7: memref<1x1x128xi32, #tpu.memory_space<vmem>>, %arg8: memref<1x1x8x1xf32, #tpu.memory_space<vmem>>, %arg9: memref<1x1x16x1xf32, #tpu.memory_space<vmem>>) attributes {dimension_semantics = [#tpu.dimension_semantics<parallel>, #tpu.dimension_semantics<parallel>], iteration_bounds = array<i64: 2, 2>, scalar_prefetch = 0 : i64, scratch_operands = 0 : i64, tpu.core_type = #tpu.core_type<tc>, window_params = [{transform_indices = @transform_0, window_bounds = array<i64: 1, 8, 128>}, {pipeline_mode = #tpu.pipeline_mode<synchronous>, transform_indices = @transform_1, window_bounds = array<i64: 16, 8>}, {pipeline_mode = #tpu.pipeline_mode<synchronous>, transform_indices = @transform_2, window_bounds = array<i64: 8, 16>}, {pipeline_mode = #tpu.pipeline_mode<synchronous>, transform_indices = @transform_3, window_bounds = array<i64: 16, 1>}, {transform_indices = @transform_4, window_bounds = array<i64: 1, 8, 128>}, {transform_indices = @transform_5, window_bounds = array<i64: 1, 1, 128>}, {transform_indices = @transform_6, window_bounds = array<i64: 1, 1, 8, 1>}, {transform_indices = @transform_7, window_bounds = array<i64: 1, 1, 16, 1>}]} {
    %c0 = arith.constant 0 : index
    %c0_0 = arith.constant 0 : index
    %c0_1 = arith.constant 0 : index
    %0 = vector.load %arg2[%c0, %c0_0, %c0_1] : memref<1x8x128xf32, #tpu.memory_space<vmem>>, vector<1x8x128xf32>
    %1 = vector.shape_cast %0 : vector<1x8x128xf32> to vector<8x128xf32>
    %c0_2 = arith.constant 0 : index
    %c0_3 = arith.constant 0 : index
    %2 = vector.load %arg3[%c0_2, %c0_3] : memref<16x8xf32, #tpu.memory_space<vmem>>, vector<16x8xf32>
    %c0_4 = arith.constant 0 : index
    %c0_5 = arith.constant 0 : index
    %3 = vector.load %arg4[%c0_4, %c0_5] : memref<8x16xf32, #tpu.memory_space<vmem>>, vector<8x16xf32>
    %c0_6 = arith.constant 0 : index
    %c0_7 = arith.constant 0 : index
    %4 = vector.load %arg5[%c0_6, %c0_7] : memref<16x1xf32, #tpu.memory_space<vmem>>, vector<16x1xf32>
    %cst = arith.constant dense<0.000000e+00> : vector<16x128xf32>
    %5 = tpu.matmul %2, %1, %cst {dimension_numbers = #tpu.dot_dimension_numbers<[1], [0], [0], [1], [0, 0, 1, 1], [], []>} : vector<16x8xf32>, vector<8x128xf32>, vector<16x128xf32> -> vector<16x128xf32>
    %6 = vector.broadcast %4 : vector<16x1xf32> to vector<16x128xf32>
    %7 = arith.addf %5, %6 : vector<16x128xf32>
    %cst_8 = arith.constant dense<0x7F800000> : vector<128xf32>
    %8 = vector.multi_reduction <minimumf>, %7, %cst_8 [0] : vector<16x128xf32> to vector<128xf32>
    %9 = vector.shape_cast %8 : vector<128xf32> to vector<1x128xf32>
    %10 = tpu.iota {dimensions = array<i32: 0>} : vector<16x128xi32>
    %11 = vector.broadcast %9 : vector<1x128xf32> to vector<16x128xf32>
    %12 = arith.cmpf ole, %7, %11 : vector<16x128xf32>
    %c16_i32 = arith.constant 16 : i32
    %13 = vector.broadcast %c16_i32 : i32 to vector<16x128xi32>
    %14 = arith.select %12, %10, %13 : vector<16x128xi1>, vector<16x128xi32>
    %cst_9 = arith.constant dense<2147483647> : vector<128xi32>
    %15 = vector.multi_reduction <minsi>, %14, %cst_9 [0] : vector<16x128xi32> to vector<128xi32>
    %16 = vector.shape_cast %15 : vector<128xi32> to vector<1x128xi32>
    %17 = vector.broadcast %16 : vector<1x128xi32> to vector<16x128xi32>
    %18 = arith.cmpi eq, %10, %17 : vector<16x128xi32>
    %19 = arith.extui %18 : vector<16x128xi1> to vector<16x128xi32>
    %20 = arith.sitofp %19 : vector<16x128xi32> to vector<16x128xf32>
    %cst_10 = arith.constant dense<0.000000e+00> : vector<8x128xf32>
    %21 = tpu.matmul %3, %20, %cst_10 {dimension_numbers = #tpu.dot_dimension_numbers<[1], [0], [0], [1], [0, 0, 1, 1], [], []>} : vector<8x16xf32>, vector<16x128xf32>, vector<8x128xf32> -> vector<8x128xf32>
    %22 = vector.shape_cast %21 : vector<8x128xf32> to vector<1x8x128xf32>
    %c0_11 = arith.constant 0 : index
    %c0_12 = arith.constant 0 : index
    %c0_13 = arith.constant 0 : index
    %23 = vector.load %arg6[%c0_11, %c0_12, %c0_13] : memref<1x8x128xf32, #tpu.memory_space<vmem>>, vector<1x8x128xf32>
    tpu.vector_store %arg6[%c0_11, %c0_12, %c0_13], %22 {strides = array<i32>} : memref<1x8x128xf32, #tpu.memory_space<vmem>>, vector<1x8x128xf32>,
    %24 = vector.shape_cast %15 : vector<128xi32> to vector<1x1x128xi32>
    %c0_14 = arith.constant 0 : index
    %c0_15 = arith.constant 0 : index
    %c0_16 = arith.constant 0 : index
    %25 = vector.load %arg7[%c0_14, %c0_15, %c0_16] : memref<1x1x128xi32, #tpu.memory_space<vmem>>, vector<1x1x128xi32>
    tpu.vector_store %arg7[%c0_14, %c0_15, %c0_16], %24 {strides = array<i32>} : memref<1x1x128xi32, #tpu.memory_space<vmem>>, vector<1x1x128xi32>,
    %26 = arith.subf %21, %1 : vector<8x128xf32>
    %27 = arith.mulf %26, %26 : vector<8x128xf32>
    %cst_17 = arith.constant dense<0.000000e+00> : vector<8xf32>
    %28 = vector.multi_reduction <add>, %27, %cst_17 [1] : vector<8x128xf32> to vector<8xf32>
    %29 = vector.shape_cast %28 : vector<8xf32> to vector<8x1xf32>
    %30 = vector.shape_cast %29 : vector<8x1xf32> to vector<1x1x8x1xf32>
    %c0_18 = arith.constant 0 : index
    %c0_19 = arith.constant 0 : index
    %c0_20 = arith.constant 0 : index
    %c0_21 = arith.constant 0 : index
    %31 = vector.load %arg8[%c0_18, %c0_19, %c0_20, %c0_21] : memref<1x1x8x1xf32, #tpu.memory_space<vmem>>, vector<1x1x8x1xf32>
    tpu.vector_store %arg8[%c0_18, %c0_19, %c0_20, %c0_21], %30 {strides = array<i32>} : memref<1x1x8x1xf32, #tpu.memory_space<vmem>>, vector<1x1x8x1xf32>,
    %cst_22 = arith.constant dense<0.000000e+00> : vector<16xf32>
    %32 = vector.multi_reduction <add>, %20, %cst_22 [1] : vector<16x128xf32> to vector<16xf32>
    %33 = vector.shape_cast %32 : vector<16xf32> to vector<16x1xf32>
    %34 = vector.shape_cast %33 : vector<16x1xf32> to vector<1x1x16x1xf32>
    %c0_23 = arith.constant 0 : index
    %c0_24 = arith.constant 0 : index
    %c0_25 = arith.constant 0 : index
    %c0_26 = arith.constant 0 : index
    %35 = vector.load %arg9[%c0_23, %c0_24, %c0_25, %c0_26] : memref<1x1x16x1xf32, #tpu.memory_space<vmem>>, vector<1x1x16x1xf32>
    tpu.vector_store %arg9[%c0_23, %c0_24, %c0_25, %c0_26], %34 {strides = array<i32>} : memref<1x1x16x1xf32, #tpu.memory_space<vmem>>, vector<1x1x16x1xf32>,
    return
  }
  func.func @transform_0(%arg0: i32, %arg1: i32) -> (i32, i32, i32) {
    %c0_i32 = arith.constant 0 : i32
    %c0_i32_0 = arith.constant 0 : i32
    return %arg0, %c0_i32, %arg1 : i32, i32, i32
  }
  func.func @transform_1(%arg0: i32, %arg1: i32) -> (i32, i32) {
    %c0_i32 = arith.constant 0 : i32
    %c0_i32_0 = arith.constant 0 : i32
    %c0_i32_1 = arith.constant 0 : i32
    return %c0_i32, %c0_i32_0 : i32, i32
  }
  func.func @transform_2(%arg0: i32, %arg1: i32) -> (i32, i32) {
    %c0_i32 = arith.constant 0 : i32
    %c0_i32_0 = arith.constant 0 : i32
    %c0_i32_1 = arith.constant 0 : i32
    return %c0_i32, %c0_i32_0 : i32, i32
  }
  func.func @transform_3(%arg0: i32, %arg1: i32) -> (i32, i32) {
    %c0_i32 = arith.constant 0 : i32
    %c0_i32_0 = arith.constant 0 : i32
    %c0_i32_1 = arith.constant 0 : i32
    return %c0_i32, %c0_i32_0 : i32, i32
  }
  func.func @transform_4(%arg0: i32, %arg1: i32) -> (i32, i32, i32) {
    %c0_i32 = arith.constant 0 : i32
    %c0_i32_0 = arith.constant 0 : i32
    return %arg0, %c0_i32, %arg1 : i32, i32, i32
  }
  func.func @transform_5(%arg0: i32, %arg1: i32) -> (i32, i32, i32) {
    %c0_i32 = arith.constant 0 : i32
    %c0_i32_0 = arith.constant 0 : i32
    return %arg0, %c0_i32, %arg1 : i32, i32, i32
  }
  func.func @transform_6(%arg0: i32, %arg1: i32) -> (i32, i32, i32, i32) {
    %c0_i32 = arith.constant 0 : i32
    %c0_i32_0 = arith.constant 0 : i32
    %c0_i32_1 = arith.constant 0 : i32
    return %arg0, %arg1, %c0_i32, %c0_i32_0 : i32, i32, i32, i32
  }
  func.func @transform_7(%arg0: i32, %arg1: i32) -> (i32, i32, i32, i32) {
    %c0_i32 = arith.constant 0 : i32
    %c0_i32_0 = arith.constant 0 : i32
    %c0_i32_1 = arith.constant 0 : i32
    return %arg0, %arg1, %c0_i32, %c0_i32_0 : i32, i32, i32, i32
  }
}

</mosaic_0001>

<llo_original>
// kernel: tpu_custom_call.1
$region0: #{tpu_custom_call.1}
  #allocation0 [shape = 'u32[]', space=smem, size = 0x4, offset = 0x4, fixed_abs, tag = 'smem constant byte address 0x4 - core index']
  #allocation1 [shape = 'u32[144,128]{1,0:T(1,128)}', space=vmem, size = 0x12000, scoped, tag = 'internal scratch']
  %s0 = inlined_call_operand.vmem [shape: f32[2,8,256], index: 0, kind: input, shape index: {}]
  %s1 = inlined_call_operand.vmem [shape: f32[16,8], index: 1, kind: input, shape index: {}]
  %s2 = inlined_call_operand.vmem [shape: f32[8,16], index: 2, kind: input, shape index: {}]
  %s3 = inlined_call_operand.vmem [shape: f32[16,1], index: 3, kind: input, shape index: {}]
  %s4 = inlined_call_operand.hbm [shape: f32[2,8,256], index: 4, kind: output, shape index: {0}]
  %s5 = inlined_call_operand.hbm [shape: s32[2,1,256], index: 5, kind: output, shape index: {1}]
  %s6 = inlined_call_operand.vmem [shape: f32[2,2,8,1], index: 6, kind: output, shape index: {2}]
  %s7 = inlined_call_operand.vmem [shape: f32[2,2,16,1], index: 7, kind: output, shape index: {3}]
  %8 = xla_tuple %s4, %s5, %s6, %s7
  %s9 = sld [smem:[#allocation0]]
  $region73: #{tpu_custom_call.1} parent=0
    _
  %s11 = ssub.s32 1, %s9
  %s12 = scalar_select 0, %s11, %s9
  $region1: #{tpu_custom_call.1} parent=0
    #allocation2 [shape = 'u8[8192]{0}', space=vmem, size = 0x2000, scoped, tag = 'output window, operand 0']
    #allocation3 [shape = 's32[2]{0}', space=sflag, size = 0x8, scoped, tag = 'scoped memory for tpu_custom_call.1']
    #allocation4 [shape = 'u8[1024]{0}', space=vmem, size = 0x400, scoped, tag = 'output window, operand 1']
    #allocation5 [shape = 's32[2]{0}', space=sflag, size = 0x8, scoped, tag = 'scoped memory for tpu_custom_call.1']
    %13 = vsyncpa [#allocation3], 0
    %s14 = scalar_lea.sflag [#allocation3], 1
    %15 = vsyncpa %s14, 0
    %16 = vsyncpa [#allocation5], 0
    %s17 = scalar_lea.sflag [#allocation5], 1
    %18 = vsyncpa %s17, 0
    loop: start=0, step=1, limit=6
    $region2: #{tpu_custom_call.1} parent=1 // loop_pre_header
      _
    $region3: #{tpu_custom_call.1} parent=1 // loop_header
      %s20 = sphi 0, %s24
      %p21 = scmp.ge.s32.totalorder %s20, 6
      %s27 = sphi 0, %s39
      %s28 = sphi 0, %s35
      %s29 = sphi 0, %s27
      %s30 = sphi 0, %s28
      %s31 = sphi 0, %s29
      %s32 = sphi 0, %s30
      %s44 = sphi 0, %s46
      %s47 = sphi 0, %s44
      %s48 = sphi 0, %s47
      %s64 = sphi 0, %s48
      %s68 = sphi 0, %s68
      %s70 = sphi 0, %s68
      %s71 = sphi 0, %s70
      %s85 = sphi 0, %s71
      %s89 = sphi 0, %s89
      %s91 = sphi 0, %s89
      %s92 = sphi 0, %s91
      %s106 = sphi 0, %s92
      %s110 = sphi 0, %s110
      %s112 = sphi 0, %s110
      %s113 = sphi 0, %s112
      %s127 = sphi 0, %s113
      %s135 = sphi 0, %s137
      %s138 = sphi 0, %s135
      %s139 = sphi 0, %s138
      %s155 = sphi 0, %s139
      %s163 = sphi 0, %s165
      %s166 = sphi 0, %s163
      %s167 = sphi 0, %s166
      %s183 = sphi 0, %s167
      %s191 = sphi 0, %s193
      %s194 = sphi 0, %s191
      %s195 = sphi 0, %s194
      %s211 = sphi 0, %s195
      %s219 = sphi 0, %s221
      %s222 = sphi 0, %s219
      %s223 = sphi 0, %s222
      %s239 = sphi 0, %s223
    $region4: #{tpu_custom_call.1} parent=1 // loop_header_branch
      %23 = sbr.rel (%p21) target = $region8
    $region5: #{tpu_custom_call.1} parent=1 // loop_body
      %s25 = ssub.s32 %s20, 1
      %s26 = ssub.s32 %s20, 2
      %s33 = sadd.s32 1, %s28
      %p34 = scmp.ge.s32.totalorder %s33, 2
      %s35 = scalar_select %p34, 0, %s33
      %s36 = sadd.s32 1, %s27
      %s37 = scalar_select %p34, %s36, %s27
      %p38 = scmp.ge.s32.totalorder %s37, 2
      %s39 = scalar_select %p38, 0, %s37
      %s40 = ssub.s32 %s27, %s39
      %s41 = ssub.s32 %s28, %s35
      %s42 = sor.u32 %s40, %s41
      %p43 = scmp.eq.s32.totalorder %s42, 0
      %s45 = sadd.s32 %s44, 1
      %s46 = scalar_select %p43, %s44, %s45
      %p49 = pneg %p43
      %p50 = scmp.eq.s32.totalorder %s20, 3
      %p51 = por %p49, %p50
      %p52 = scmp.ne.s32.totalorder %s44, %s47
      %p53 = scmp.eq.s32.totalorder %s20, 0
      %p54 = por %p52, %p53
      %p55 = scmp.ne.s32.totalorder %s44, %s47
      %p56 = scmp.eq.s32.totalorder %s25, 3
      %p57 = por %p55, %p56
      %p58 = scmp.ne.s32.totalorder %s47, %s48
      %p59 = scmp.eq.s32.totalorder %s25, 0
      %p60 = por %p58, %p59
      %p61 = scmp.ne.s32.totalorder %s47, %s48
      %p62 = scmp.eq.s32.totalorder %s26, 3
      %p63 = por %p61, %p62
      %p65 = scmp.ne.s32.totalorder %s48, %s64
      %p66 = scmp.eq.s32.totalorder %s26, 0
      %p67 = por %p65, %p66
      %s69 = sadd.s32 %s68, 1
      %p72 = scmp.eq.s32.totalorder %s20, 3
      %p73 = scmp.ne.s32.totalorder %s68, %s70
      %p74 = scmp.eq.s32.totalorder %s20, 0
      %p75 = por %p73, %p74
      %p76 = scmp.ne.s32.totalorder %s68, %s70
      %p77 = scmp.eq.s32.totalorder %s25, 3
      %p78 = por %p76, %p77
      %p79 = scmp.ne.s32.totalorder %s70, %s71
      %p80 = scmp.eq.s32.totalorder %s25, 0
      %p81 = por %p79, %p80
      %p82 = scmp.ne.s32.totalorder %s70, %s71
      %p83 = scmp.eq.s32.totalorder %s26, 3
      %p84 = por %p82, %p83
      %p86 = scmp.ne.s32.totalorder %s71, %s85
      %p87 = scmp.eq.s32.totalorder %s26, 0
      %p88 = por %p86, %p87
      %s90 = sadd.s32 %s89, 1
      %p93 = scmp.eq.s32.totalorder %s20, 3
      %p94 = scmp.ne.s32.totalorder %s89, %s91
      %p95 = scmp.eq.s32.totalorder %s20, 0
      %p96 = por %p94, %p95
      %p97 = scmp.ne.s32.totalorder %s89, %s91
      %p98 = scmp.eq.s32.totalorder %s25, 3
      %p99 = por %p97, %p98
      %p100 = scmp.ne.s32.totalorder %s91, %s92
      %p101 = scmp.eq.s32.totalorder %s25, 0
      %p102 = por %p100, %p101
      %p103 = scmp.ne.s32.totalorder %s91, %s92
      %p104 = scmp.eq.s32.totalorder %s26, 3
      %p105 = por %p103, %p104
      %p107 = scmp.ne.s32.totalorder %s92, %s106
      %p108 = scmp.eq.s32.totalorder %s26, 0
      %p109 = por %p107, %p108
      %s111 = sadd.s32 %s110, 1
      %p114 = scmp.eq.s32.totalorder %s20, 3
      %p115 = scmp.ne.s32.totalorder %s110, %s112
      %p116 = scmp.eq.s32.totalorder %s20, 0
      %p117 = por %p115, %p116
      %p118 = scmp.ne.s32.totalorder %s110, %s112
      %p119 = scmp.eq.s32.totalorder %s25, 3
      %p120 = por %p118, %p119
      %p121 = scmp.ne.s32.totalorder %s112, %s113
      %p122 = scmp.eq.s32.totalorder %s25, 0
      %p123 = por %p121, %p122
      %p124 = scmp.ne.s32.totalorder %s112, %s113
      %p125 = scmp.eq.s32.totalorder %s26, 3
      %p126 = por %p124, %p125
      %p128 = scmp.ne.s32.totalorder %s113, %s127
      %p129 = scmp.eq.s32.totalorder %s26, 0
      %p130 = por %p128, %p129
      %s131 = ssub.s32 %s27, %s39
      %s132 = ssub.s32 %s28, %s35
      %s133 = sor.u32 %s131, %s132
      %p134 = scmp.eq.s32.totalorder %s133, 0
      %s136 = sadd.s32 %s135, 1
      %s137 = scalar_select %p134, %s135, %s136
      %p140 = pneg %p134
      %p141 = scmp.eq.s32.totalorder %s20, 3
      %p142 = por %p140, %p141
      %p143 = scmp.ne.s32.totalorder %s135, %s138
      %p144 = scmp.eq.s32.totalorder %s20, 0
      %p145 = por %p143, %p144
      %p146 = scmp.ne.s32.totalorder %s135, %s138
      %p147 = scmp.eq.s32.totalorder %s25, 3
      %p148 = por %p146, %p147
      %p149 = scmp.ne.s32.totalorder %s138, %s139
      %p150 = scmp.eq.s32.totalorder %s25, 0
      %p151 = por %p149, %p150
      %p152 = scmp.ne.s32.totalorder %s138, %s139
      %p153 = scmp.eq.s32.totalorder %s26, 3
      %p154 = por %p152, %p153
      %p156 = scmp.ne.s32.totalorder %s139, %s155
      %p157 = scmp.eq.s32.totalorder %s26, 0
      %p158 = por %p156, %p157
      %s159 = ssub.s32 %s27, %s39
      %s160 = ssub.s32 %s28, %s35
      %s161 = sor.u32 %s159, %s160
      %p162 = scmp.eq.s32.totalorder %s161, 0
      %s164 = sadd.s32 %s163, 1
      %s165 = scalar_select %p162, %s163, %s164
      %p168 = pneg %p162
      %p169 = scmp.eq.s32.totalorder %s20, 3
      %p170 = por %p168, %p169
      %p171 = scmp.ne.s32.totalorder %s163, %s166
      %p172 = scmp.eq.s32.totalorder %s20, 0
      %p173 = por %p171, %p172
      %p174 = scmp.ne.s32.totalorder %s163, %s166
      %p175 = scmp.eq.s32.totalorder %s25, 3
      %p176 = por %p174, %p175
      %p177 = scmp.ne.s32.totalorder %s166, %s167
      %p178 = scmp.eq.s32.totalorder %s25, 0
      %p179 = por %p177, %p178
      %p180 = scmp.ne.s32.totalorder %s166, %s167
      %p181 = scmp.eq.s32.totalorder %s26, 3
      %p182 = por %p180, %p181
      %p184 = scmp.ne.s32.totalorder %s167, %s183
      %p185 = scmp.eq.s32.totalorder %s26, 0
      %p186 = por %p184, %p185
      %s187 = ssub.s32 %s27, %s39
      %s188 = ssub.s32 %s28, %s35
      %s189 = sor.u32 %s187, %s188
      %p190 = scmp.eq.s32.totalorder %s189, 0
      %s192 = sadd.s32 %s191, 1
      %s193 = scalar_select %p190, %s191, %s192
      %p196 = pneg %p190
      %p197 = scmp.eq.s32.totalorder %s20, 3
      %p198 = por %p196, %p197
      %p199 = scmp.ne.s32.totalorder %s191, %s194
      %p200 = scmp.eq.s32.totalorder %s20, 0
      %p201 = por %p199, %p200
      %p202 = scmp.ne.s32.totalorder %s191, %s194
      %p203 = scmp.eq.s32.totalorder %s25, 3
      %p204 = por %p202, %p203
      %p205 = scmp.ne.s32.totalorder %s194, %s195
      %p206 = scmp.eq.s32.totalorder %s25, 0
      %p207 = por %p205, %p206
      %p208 = scmp.ne.s32.totalorder %s194, %s195
      %p209 = scmp.eq.s32.totalorder %s26, 3
      %p210 = por %p208, %p209
      %p212 = scmp.ne.s32.totalorder %s195, %s211
      %p213 = scmp.eq.s32.totalorder %s26, 0
      %p214 = por %p212, %p213
      %s215 = ssub.s32 %s27, %s39
      %s216 = ssub.s32 %s28, %s35
      %s217 = sor.u32 %s215, %s216
      %p218 = scmp.eq.s32.totalorder %s217, 0
      %s220 = sadd.s32 %s219, 1
      %s221 = scalar_select %p218, %s219, %s220
      %p224 = pneg %p218
      %p225 = scmp.eq.s32.totalorder %s20, 3
      %p226 = por %p224, %p225
      %p227 = scmp.ne.s32.totalorder %s219, %s222
      %p228 = scmp.eq.s32.totalorder %s20, 0
      %p229 = por %p227, %p228
      %p230 = scmp.ne.s32.totalorder %s219, %s222
      %p231 = scmp.eq.s32.totalorder %s25, 3
      %p232 = por %p230, %p231
      %p233 = scmp.ne.s32.totalorder %s222, %s223
      %p234 = scmp.eq.s32.totalorder %s25, 0
      %p235 = por %p233, %p234
      %p236 = scmp.ne.s32.totalorder %s222, %s223
      %p237 = scmp.eq.s32.totalorder %s26, 3
      %p238 = por %p236, %p237
      %p240 = scmp.ne.s32.totalorder %s223, %s239
      %p241 = scmp.eq.s32.totalorder %s26, 0
      %p242 = por %p240, %p241
      %p243 = scmp.le.s32.totalorder 1, %s20
      %p244 = scmp.lt.s32.totalorder %s20, 5
      %p245 = pnand %p243, %p244
      %p246 = pneg %p245
      // Predicated region
      $region9: #{tpu_custom_call.1} parent=5 // pred_check
        _
      $region10: #{tpu_custom_call.1} parent=5 // pred_check_branch
        %248 = sbr.rel (%p245) target = $region12
      $region11: #{tpu_custom_call.1} parent=5 // pred_region
        %s249 = ssub.s32 %s20, 1
        // Predicated region
        $region13: #{tpu_custom_call.1} parent=11 // pred_check
          %p250 = pneg %p81
        $region14: #{tpu_custom_call.1} parent=11 // pred_check_branch
          %252 = sbr.rel (%p250) target = $region16
        $region15: #{tpu_custom_call.1} parent=11 // pred_region
          _
        $region16: #{tpu_custom_call.1} parent=11 // pred_fallthru
          _
        // Predicated region
        $region17: #{tpu_custom_call.1} parent=11 // pred_check
          %p253 = pneg %p102
        $region18: #{tpu_custom_call.1} parent=11 // pred_check_branch
          %255 = sbr.rel (%p253) target = $region20
        $region19: #{tpu_custom_call.1} parent=11 // pred_region
          _
        $region20: #{tpu_custom_call.1} parent=11 // pred_fallthru
          _
        // Predicated region
        $region21: #{tpu_custom_call.1} parent=11 // pred_check
          %p256 = pneg %p123
        $region22: #{tpu_custom_call.1} parent=11 // pred_check_branch
          %258 = sbr.rel (%p256) target = $region24
        $region23: #{tpu_custom_call.1} parent=11 // pred_region
          _
        $region24: #{tpu_custom_call.1} parent=11 // pred_fallthru
          _
      $region12: #{tpu_custom_call.1} parent=5 // pred_fallthru
        _
      %p259 = scmp.lt.s32.totalorder %s20, 4
      // Predicated region
      $region25: #{tpu_custom_call.1} parent=5 // pred_check
        %p260 = pneg %p259
      $region26: #{tpu_custom_call.1} parent=5 // pred_check_branch
        %262 = sbr.rel (%p260) target = $region28
      $region27: #{tpu_custom_call.1} parent=5 // pred_region
        // Predicated region
        $region29: #{tpu_custom_call.1} parent=27 // pred_check
          %p263 = pneg %p54
        $region30: #{tpu_custom_call.1} parent=27 // pred_check_branch
          %265 = sbr.rel (%p263) target = $region32
        $region31: #{tpu_custom_call.1} parent=27 // pred_region
          %p266 = scmp.lt.s32.totalorder %s27, 1
          %s267 = scalar_select %p266, %s27, 1
          %p268 = scmp.lt.s32.totalorder %s28, 1
          %s269 = scalar_select %p268, %s28, 1
          %s270 = smul.addr %s267, 2
          %s271 = sadd.s32 %s269, %s270
          %s272 = smul.addr %s271, 8
          %s273 = scalar_lea.vmem %s0, %s272
        $region32: #{tpu_custom_call.1} parent=27 // pred_fallthru
          _
      $region28: #{tpu_custom_call.1} parent=5 // pred_fallthru
        _
      %p274 = scmp.le.s32.totalorder 1, %s20
      %p275 = scmp.lt.s32.totalorder %s20, 5
      %p276 = pnand %p274, %p275
      %p277 = pneg %p276
      // Predicated region
      $region33: #{tpu_custom_call.1} parent=5 // pred_check
        _
      $region34: #{tpu_custom_call.1} parent=5 // pred_check_branch
        %279 = sbr.rel (%p276) target = $region36
      $region35: #{tpu_custom_call.1} parent=5 // pred_region
        %s280 = ssub.s32 %s20, 1
        %p281 = scmp.lt.s32.totalorder %s29, 1
        %s282 = scalar_select %p281, %s29, 1
        %p283 = scmp.lt.s32.totalorder %s30, 1
        %s284 = scalar_select %p283, %s30, 1
        %s285 = smul.addr %s282, 2
        %s286 = sadd.s32 %s284, %s285
        %s287 = smul.addr %s286, 8
        %s288 = scalar_lea.vmem %s0, %s287
        %p289 = pneg %p60
        %p290 = pneg %p57
        %p291 = pneg %p81
        %p292 = pneg %p78
        %p293 = pneg %p102
        %p294 = pneg %p99
        %p295 = pneg %p123
        %p296 = pneg %p120
        %p297 = pneg %p151
        %p298 = pneg %p148
        %s299 = sand.u32 %s138, 1
        %s300 = scalar_lea.sflag [#allocation3], %s299
        %s301 = sand.u32 %s138, 1
        %s302 = smul.addr %s301, 8
        %s303 = scalar_lea.vmem [#allocation2], %s302
        %p304 = pneg %p179
        %p305 = pneg %p176
        %s306 = sand.u32 %s166, 1
        %s307 = scalar_lea.sflag [#allocation5], %s306
        %s308 = sand.u32 %s166, 1
        %s309 = scalar_lea.vmem [#allocation4], %s308
        %p310 = pneg %p207
        %p311 = pneg %p204
        %p312 = scmp.lt.s32.totalorder %s29, 1
        %s313 = scalar_select %p312, %s29, 1
        %p314 = scmp.lt.s32.totalorder %s30, 1
        %s315 = scalar_select %p314, %s30, 1
        %s316 = smul.addr %s313, 2
        %s317 = sadd.s32 %s315, %s316
        %s318 = smul.addr %s317, 8
        %s319 = scalar_lea.vmem %s6, %s318
        %p320 = pneg %p235
        %p321 = pneg %p232
        %p322 = scmp.lt.s32.totalorder %s29, 1
        %s323 = scalar_select %p322, %s29, 1
        %p324 = scmp.lt.s32.totalorder %s30, 1
        %s325 = scalar_select %p324, %s30, 1
        %s326 = smul.addr %s325, 2
        %s327 = smul.addr %s323, 4
        %s328 = sadd.s32 %s326, %s327
        %s329 = smul.addr %s328, 8
        %s330 = scalar_lea.vmem %s7, %s329
        %p331 = scmp.lt.s32.totalorder %s29, 1
        %s332 = scalar_select %p331, %s29, 1
        %p333 = scmp.lt.s32.totalorder %s30, 1
        %s334 = scalar_select %p333, %s30, 1
        %s335 = smul.addr %s332, 2
        %s336 = sadd.s32 %s334, %s335
        %s337 = smul.addr %s336, 8
        %s338 = scalar_lea.vmem %s0, %s337
        %p339 = scmp.lt.s32.totalorder %s29, 1
        %s340 = scalar_select %p339, %s29, 1
        %p341 = scmp.lt.s32.totalorder %s30, 1
        %s342 = scalar_select %p341, %s30, 1
        %s343 = smul.addr %s340, 2
        %s344 = sadd.s32 %s342, %s343
        %s345 = smul.addr %s344, 8
        %s346 = scalar_lea.vmem %s6, %s345
        %p347 = scmp.lt.s32.totalorder %s29, 1
        %s348 = scalar_select %p347, %s29, 1
        %p349 = scmp.lt.s32.totalorder %s30, 1
        %s350 = scalar_select %p349, %s30, 1
        %s351 = smul.addr %s350, 2
        %s352 = smul.addr %s348, 4
        %s353 = sadd.s32 %s351, %s352
        %s354 = smul.addr %s353, 8
        %s355 = scalar_lea.vmem %s7, %s354
        %v356 = vld [vmem:[%s338] sm:$0xff]
        %v357 = vld [vmem:[%s1] sm:$0xff]
        %v358 = vld [vmem:[%s1 + $0x8] sm:$0xff]
        %v359 = vld [vmem:[%s2] sm:$0xff]
        %v360 = vld [vmem:[%s3] sm:$0xff]
        %v361 = vld [vmem:[%s3 + $0x8] sm:$0xff]
        %363 = vset.pattern.permute.xlu0 0
        %364 = vperm.xlu0 %363, %v360
        %v365 = vpop.permute.xlu0 %364
        %368 = vset.pattern.permute.xlu0 0
        %369 = vperm.xlu0 %368, %v361
        %v370 = vpop.permute.xlu0 %369
        %vm372 = vcmask 64512
        %v374 = vsel %vm372, %v357, 0
        %v377 = vsel %vm372, %v358, 0
        %379 = vmatprep.subr.mxu0 0.0
        %380 = vmatpush1.msra.mxu0 0.0
        %381 = vmatprep.subr.mxu0 0.0
        %382 = vmatpush1.msra.mxu0 0.0
        %383 = vmatprep.subr.mxu0 0.0
        %384 = vmatpush1.msra.mxu0 0.0
        %385 = vmatprep.subr.mxu0 0.0
        %386 = vmatpush1.msra.mxu0 0.0
        %387 = vmatprep.subr.mxu0 0.0
        %388 = vmatpush1.msra.mxu0 0.0
        %389 = vmatprep.subr.mxu0 0.0
        %390 = vmatpush1.msra.mxu0 0.0
        %391 = vmatprep.subr.mxu0 0.0
        %392 = vmatpush1.msra.mxu0 0.0
        %393 = vmatprep.subr.mxu0 0.0
        %394 = vmatpush1.msra.mxu0 0.0
        %395 = vmatprep.subr.mxu0 0.0
        %396 = vmatpush1.msra.mxu0 0.0
        %397 = vmatprep.subr.mxu0 0.0
        %398 = vmatpush1.msra.mxu0 0.0
        %399 = vmatprep.subr.mxu0 0.0
        %400 = vmatpush1.msra.mxu0 0.0
        %401 = vmatprep.subr.mxu0 0.0
        %402 = vmatpush1.msra.mxu0 0.0
        %403 = vmatprep.subr.mxu0 0.0
        %404 = vmatpush1.msra.mxu0 0.0
        %405 = vmatprep.subr.mxu0 0.0
        %406 = vmatpush1.msra.mxu0 0.0
        %407 = vmatprep.subr.mxu0 0.0
        %408 = vmatpush1.msra.mxu0 0.0
        %409 = vmatprep.subr.mxu0 0.0
        %410 = vmatpush1.msra.mxu0 %v356
        %411 = vmatprep.subr.mxu0 0.0
        %412 = vmatpush2.msra.mxu0 0.0
        %413 = vmatprep.subr.mxu0 0.0
        %414 = vmatpush2.msra.mxu0 0.0
        %415 = vmatprep.subr.mxu0 0.0
        %416 = vmatpush2.msra.mxu0 0.0
        %417 = vmatprep.subr.mxu0 0.0
        %418 = vmatpush2.msra.mxu0 0.0
        %419 = vmatprep.subr.mxu0 0.0
        %420 = vmatpush2.msra.mxu0 0.0
        %421 = vmatprep.subr.mxu0 0.0
        %422 = vmatpush2.msra.mxu0 0.0
        %423 = vmatprep.subr.mxu0 0.0
        %424 = vmatpush2.msra.mxu0 0.0
        %425 = vmatprep.subr.mxu0 0.0
        %426 = vmatpush2.msra.mxu0 0.0
        %427 = vmatprep.subr.mxu0 0.0
        %428 = vmatpush2.msra.mxu0 0.0
        %429 = vmatprep.subr.mxu0 0.0
        %430 = vmatpush2.msra.mxu0 0.0
        %431 = vmatprep.subr.mxu0 0.0
        %432 = vmatpush2.msra.mxu0 0.0
        %433 = vmatprep.subr.mxu0 0.0
        %434 = vmatpush2.msra.mxu0 0.0
        %435 = vmatprep.subr.mxu0 0.0
        %436 = vmatpush2.msra.mxu0 0.0
        %437 = vmatprep.subr.mxu0 0.0
        %438 = vmatpush2.msra.mxu0 0.0
        %439 = vmatprep.subr.mxu0 0.0
        %440 = vmatpush2.msra.mxu0 0.0
        %441 = vmatprep.subr.mxu0 0.0
        %442 = vmatpush2.msra.mxu0 0.0
        %443 = vmatprep.mubr.f32.mxu0 0.0
        %444 = vmatmul.mubr.f32.gmra.mxu0 %v374
        %v445 = vpop.f32.mrf.mxu0
        %v446 = vadd.f32 %v365, %v445
        %v447 = vpop.f32.mrf.mxu0
        %448 = vmatprep.mubr.f32.mxu0 0.0
        %449 = vmatmul.mubr.f32.gmra.mxu0 %v377
        %v450 = vpop.f32.mrf.mxu0
        %v451 = vadd.f32 %v370, %v450
        %v452 = vpop.f32.mrf.mxu0
        %453 = vdwg.mxu0
        %v454 = vmin.f32 %v446, %v451
        %v455 = vrot.slane %v454, 4
        %v456 = vmin.f32 %v454, %v455
        %v457 = vrot.slane %v456, 2
        %v458 = vmin.f32 %v456, %v457
        %v459 = vrot.slane %v458, 1
        %v460 = vmin.f32 %v458, %v459
        %v461 = vlaneseq
        %v462 = vshrl.u32 %v461, 7
        %v463 = vadd.s32 %v462, 8
        %vm464 = vcmp.le.f32.partialorder %v446, %v460
        %vm465 = vcmp.le.f32.partialorder %v451, %v460
        %v466 = vsel %vm464, %v462, 16
        %v467 = vsel %vm465, %v463, 16
        %vm468 = vcmp.lt.s32.totalorder %v466, %v467
        %v469 = vsel %vm468, %v466, %v467
        %v470 = vrot.slane %v469, 4
        %vm471 = vcmp.lt.s32.totalorder %v469, %v470
        %v472 = vsel %vm471, %v469, %v470
        %v473 = vrot.slane %v472, 2
        %vm474 = vcmp.lt.s32.totalorder %v472, %v473
        %v475 = vsel %vm474, %v472, %v473
        %v476 = vrot.slane %v475, 1
        %vm477 = vcmp.lt.s32.totalorder %v475, %v476
        %v478 = vsel %vm477, %v475, %v476
        %vm479 = vcmp.eq.s32.totalorder %v462, %v478
        %vm480 = vcmp.eq.s32.totalorder %v463, %v478
        %v481 = vsel %vm479, 1, 0
        %v482 = vsel %vm480, 1, 0
        %v483 = vcvt.s32.f32 %v481
        %v484 = vcvt.s32.f32 %v482
        %vm485 = vcmask 130048
        %v487 = vsel %vm485, %v359, 0
        %489 = vmatprep.subr.mxu0 0.0
        %490 = vmatpush1.msra.mxu0 0.0
        %491 = vmatprep.subr.mxu0 0.0
        %492 = vmatpush1.msra.mxu0 0.0
        %493 = vmatprep.subr.mxu0 0.0
        %494 = vmatpush1.msra.mxu0 0.0
        %495 = vmatprep.subr.mxu0 0.0
        %496 = vmatpush1.msra.mxu0 0.0
        %497 = vmatprep.subr.mxu0 0.0
        %498 = vmatpush1.msra.mxu0 0.0
        %499 = vmatprep.subr.mxu0 0.0
        %500 = vmatpush1.msra.mxu0 0.0
        %501 = vmatprep.subr.mxu0 0.0
        %502 = vmatpush1.msra.mxu0 0.0
        %503 = vmatprep.subr.mxu0 0.0
        %504 = vmatpush1.msra.mxu0 0.0
        %505 = vmatprep.subr.mxu0 0.0
        %506 = vmatpush1.msra.mxu0 0.0
        %507 = vmatprep.subr.mxu0 0.0
        %508 = vmatpush1.msra.mxu0 0.0
        %509 = vmatprep.subr.mxu0 0.0
        %510 = vmatpush1.msra.mxu0 0.0
        %511 = vmatprep.subr.mxu0 0.0
        %512 = vmatpush1.msra.mxu0 0.0
        %513 = vmatprep.subr.mxu0 0.0
        %514 = vmatpush1.msra.mxu0 0.0
        %515 = vmatprep.subr.mxu0 0.0
        %516 = vmatpush1.msra.mxu0 0.0
        %517 = vmatprep.subr.mxu0 0.0
        %518 = vmatpush1.msra.mxu0 %v484
        %519 = vmatprep.subr.mxu0 0.0
        %520 = vmatpush1.msra.mxu0 %v483
        %521 = vmatprep.subr.mxu0 0.0
        %522 = vmatpush2.msra.mxu0 0.0
        %523 = vmatprep.subr.mxu0 0.0
        %524 = vmatpush2.msra.mxu0 0.0
        %525 = vmatprep.subr.mxu0 0.0
        %526 = vmatpush2.msra.mxu0 0.0
        %527 = vmatprep.subr.mxu0 0.0
        %528 = vmatpush2.msra.mxu0 0.0
        %529 = vmatprep.subr.mxu0 0.0
        %530 = vmatpush2.msra.mxu0 0.0
        %531 = vmatprep.subr.mxu0 0.0
        %532 = vmatpush2.msra.mxu0 0.0
        %533 = vmatprep.subr.mxu0 0.0
        %534 = vmatpush2.msra.mxu0 0.0
        %535 = vmatprep.subr.mxu0 0.0
        %536 = vmatpush2.msra.mxu0 0.0
        %537 = vmatprep.subr.mxu0 0.0
        %538 = vmatpush2.msra.mxu0 0.0
        %539 = vmatprep.subr.mxu0 0.0
        %540 = vmatpush2.msra.mxu0 0.0
        %541 = vmatprep.subr.mxu0 0.0
        %542 = vmatpush2.msra.mxu0 0.0
        %543 = vmatprep.subr.mxu0 0.0
        %544 = vmatpush2.msra.mxu0 0.0
        %545 = vmatprep.subr.mxu0 0.0
        %546 = vmatpush2.msra.mxu0 0.0
        %547 = vmatprep.subr.mxu0 0.0
        %548 = vmatpush2.msra.mxu0 0.0
        %549 = vmatprep.subr.mxu0 0.0
        %550 = vmatpush2.msra.mxu0 0.0
        %551 = vmatprep.subr.mxu0 0.0
        %552 = vmatpush2.msra.mxu0 0.0
        %553 = vmatprep.mubr.f32.mxu0 0.0
        %554 = vmatmul.mubr.f32.gmra.mxu0 %v487
        %v555 = vpop.f32.mrf.mxu0
        %v556 = vadd.f32 0.0, %v555
        %v557 = vpop.f32.mrf.mxu0
        %558 = vdwg.mxu0
        %559 = vst [vmem:[%s303] sm:$0xff] %v556
        %560 = vst [vmem:[%s309] sm:$0x1] %v478
        %v561 = vsub.f32 %v556, %v356
        %v562 = vmul.f32 %v561, %v561
        %563 = vadd.xlane.f32.xlu0 %v562
        %v564 = vpop.xlane.xlu0 %563
        %vm565 = vcmask 7168
        %566 = vst.msk [vmem:[%s346] sm:$0xff] %vm565, %v564
        %567 = vadd.xlane.f32.xlu0 %v483
        %v568 = vpop.xlane.xlu0 %567
        %569 = vadd.xlane.f32.xlu0 %v484
        %v570 = vpop.xlane.xlu0 %569
        %571 = vst.msk [vmem:[%s355] sm:$0xff] %vm565, %v568
        %572 = vst.msk [vmem:[%s355 + $0x8] sm:$0xff] %vm565, %v570
        %s573 = sand.u32 %s138, 1
        %s574 = scalar_lea.sflag [#allocation3], %s573
        %s575 = sand.u32 %s138, 1
        %s576 = smul.addr %s575, 8
        %s577 = scalar_lea.vmem [#allocation2], %s576
        %s578 = sand.u32 %s166, 1
        %s579 = scalar_lea.sflag [#allocation5], %s578
        %s580 = sand.u32 %s166, 1
        %s581 = scalar_lea.vmem [#allocation4], %s580
        %p582 = scmp.lt.s32.totalorder %s29, 1
        %s583 = scalar_select %p582, %s29, 1
        %p584 = scmp.lt.s32.totalorder %s30, 1
        %s585 = scalar_select %p584, %s30, 1
        %s586 = smul.addr %s583, 2
        %s587 = sadd.s32 %s585, %s586
        %s588 = smul.addr %s587, 8
        %s589 = scalar_lea.vmem %s6, %s588
        %p590 = scmp.lt.s32.totalorder %s29, 1
        %s591 = scalar_select %p590, %s29, 1
        %p592 = scmp.lt.s32.totalorder %s30, 1
        %s593 = scalar_select %p592, %s30, 1
        %s594 = smul.addr %s593, 2
        %s595 = smul.addr %s591, 4
        %s596 = sadd.s32 %s594, %s595
        %s597 = smul.addr %s596, 8
        %s598 = scalar_lea.vmem %s7, %s597
        // Predicated region
        $region37: #{tpu_custom_call.1} parent=35 // pred_check
          %p599 = pneg %p148
        $region38: #{tpu_custom_call.1} parent=35 // pred_check_branch
          %601 = sbr.rel (%p599) target = $region40
        $region39: #{tpu_custom_call.1} parent=35 // pred_region
          %s603 = ssub.s32 128, 128
          %604 = vsyncadd %s574, %s603
          %s605 = smul.addr %s29, 2
          %s606 = sadd.s32 %s30, %s605
          %s607 = smul.addr %s606, 128
          %s608 = scalar_lea.hbm %s4, %s607
          %s610 = sshll.u32 %s577, 4
          %s611 = int_to_ptr.vmem [resolvable:$true] %s610
          %613 = dma.vmem_to_hbm [thread:$0]  %s611, 128, %s608, %s574
        $region40: #{tpu_custom_call.1} parent=35 // pred_fallthru
          _
        // Predicated region
        $region41: #{tpu_custom_call.1} parent=35 // pred_check
          %p614 = pneg %p176
        $region42: #{tpu_custom_call.1} parent=35 // pred_check_branch
          %616 = sbr.rel (%p614) target = $region44
        $region43: #{tpu_custom_call.1} parent=35 // pred_region
          %s618 = ssub.s32 16, 16
          %619 = vsyncadd %s579, %s618
          %s620 = smul.addr %s29, 2
          %s621 = sadd.s32 %s30, %s620
          %s622 = smul.addr %s621, 16
          %s623 = scalar_lea.hbm %s5, %s622
          %s625 = sshll.u32 %s581, 4
          %s626 = int_to_ptr.vmem [resolvable:$true] %s625
          %628 = dma.vmem_to_hbm [thread:$0]  %s626, 16, %s623, %s579
        $region44: #{tpu_custom_call.1} parent=35 // pred_fallthru
          _
        // Predicated region
        $region45: #{tpu_custom_call.1} parent=35 // pred_check
          %p629 = pneg %p204
        $region46: #{tpu_custom_call.1} parent=35 // pred_check_branch
          %631 = sbr.rel (%p629) target = $region48
        $region47: #{tpu_custom_call.1} parent=35 // pred_region
          _
        $region48: #{tpu_custom_call.1} parent=35 // pred_fallthru
          _
        // Predicated region
        $region49: #{tpu_custom_call.1} parent=35 // pred_check
          %p632 = pneg %p232
        $region50: #{tpu_custom_call.1} parent=35 // pred_check_branch
          %634 = sbr.rel (%p632) target = $region52
        $region51: #{tpu_custom_call.1} parent=35 // pred_region
          _
        $region52: #{tpu_custom_call.1} parent=35 // pred_fallthru
          _
      $region36: #{tpu_custom_call.1} parent=5 // pred_fallthru
        _
      %p635 = scmp.le.s32.totalorder 2, %s20
      // Predicated region
      $region53: #{tpu_custom_call.1} parent=5 // pred_check
        %p636 = pneg %p635
      $region54: #{tpu_custom_call.1} parent=5 // pred_check_branch
        %638 = sbr.rel (%p636) target = $region56
      $region55: #{tpu_custom_call.1} parent=5 // pred_region
        %s639 = ssub.s32 %s20, 2
        // Predicated region
        $region57: #{tpu_custom_call.1} parent=55 // pred_check
          %p640 = pneg %p154
        $region58: #{tpu_custom_call.1} parent=55 // pred_check_branch
          %642 = sbr.rel (%p640) target = $region60
        $region59: #{tpu_custom_call.1} parent=55 // pred_region
          %s643 = sand.u32 %s139, 1
          %s644 = scalar_lea.sflag [#allocation3], %s643
          %s645 = sand.u32 %s139, 1
          %s646 = smul.addr %s645, 8
          %s647 = scalar_lea.vmem [#allocation2], %s646
          %648 = dma.done %s644, 128
        $region60: #{tpu_custom_call.1} parent=55 // pred_fallthru
          _
        // Predicated region
        $region61: #{tpu_custom_call.1} parent=55 // pred_check
          %p649 = pneg %p182
        $region62: #{tpu_custom_call.1} parent=55 // pred_check_branch
          %651 = sbr.rel (%p649) target = $region64
        $region63: #{tpu_custom_call.1} parent=55 // pred_region
          %s652 = sand.u32 %s167, 1
          %s653 = scalar_lea.sflag [#allocation5], %s652
          %s654 = sand.u32 %s167, 1
          %s655 = scalar_lea.vmem [#allocation4], %s654
          %656 = dma.done %s653, 16
        $region64: #{tpu_custom_call.1} parent=55 // pred_fallthru
          _
        // Predicated region
        $region65: #{tpu_custom_call.1} parent=55 // pred_check
          %p657 = pneg %p210
        $region66: #{tpu_custom_call.1} parent=55 // pred_check_branch
          %659 = sbr.rel (%p657) target = $region68
        $region67: #{tpu_custom_call.1} parent=55 // pred_region
          %p660 = scmp.lt.s32.totalorder %s31, 1
          %s661 = scalar_select %p660, %s31, 1
          %p662 = scmp.lt.s32.totalorder %s32, 1
          %s663 = scalar_select %p662, %s32, 1
          %s664 = smul.addr %s661, 2
          %s665 = sadd.s32 %s663, %s664
          %s666 = smul.addr %s665, 8
          %s667 = scalar_lea.vmem %s6, %s666
        $region68: #{tpu_custom_call.1} parent=55 // pred_fallthru
          _
        // Predicated region
        $region69: #{tpu_custom_call.1} parent=55 // pred_check
          %p668 = pneg %p238
        $region70: #{tpu_custom_call.1} parent=55 // pred_check_branch
          %670 = sbr.rel (%p668) target = $region72
        $region71: #{tpu_custom_call.1} parent=55 // pred_region
          %p671 = scmp.lt.s32.totalorder %s31, 1
          %s672 = scalar_select %p671, %s31, 1
          %p673 = scmp.lt.s32.totalorder %s32, 1
          %s674 = scalar_select %p673, %s32, 1
          %s675 = smul.addr %s674, 2
          %s676 = smul.addr %s672, 4
          %s677 = sadd.s32 %s675, %s676
          %s678 = smul.addr %s677, 8
          %s679 = scalar_lea.vmem %s7, %s678
        $region72: #{tpu_custom_call.1} parent=55 // pred_fallthru
          _
      $region56: #{tpu_custom_call.1} parent=5 // pred_fallthru
        _
    $region6: #{tpu_custom_call.1} parent=1 // loop_footer
      %s24 = sadd.s32 1, %s20
    $region7: #{tpu_custom_call.1} parent=1 // loop_footer_branch
      %19 = sbr.rel target = $region3
    $region8: #{tpu_custom_call.1} parent=1 // loop_exit
      _
    %680 = vsyncpa [#allocation3], 1
    %s681 = scalar_lea.sflag [#allocation3], 1
    %682 = vsyncpa %s681, 1
    %683 = vsyncpa [#allocation5], 1
    %s684 = scalar_lea.sflag [#allocation5], 1
    %685 = vsyncpa %s684, 1

// kernel: tpu_custom_call.1
$region0: #{tpu_custom_call.1}
  #allocation0 [shape = 'u32[]', space=smem, size = 0x4, offset = 0x4, fixed_abs, tag = 'smem constant byte address 0x4 - core index']
  #allocation1 [shape = 'u32[144,128]{1,0:T(1,128)}', space=vmem, size = 0x12000, scoped, tag = 'internal scratch']
  %s0 = inlined_call_operand.vmem [shape: f32[2,8,256], index: 0, kind: input, shape index: {}]
  %s1 = inlined_call_operand.vmem [shape: f32[16,8], index: 1, kind: input, shape index: {}]
  %s2 = inlined_call_operand.vmem [shape: f32[8,16], index: 2, kind: input, shape index: {}]
  %s3 = inlined_call_operand.vmem [shape: f32[16,1], index: 3, kind: input, shape index: {}]
  %s4 = inlined_call_operand.hbm [shape: f32[2,8,256], index: 4, kind: output, shape index: {0}]
  %s5 = inlined_call_operand.hbm [shape: s32[2,1,256], index: 5, kind: output, shape index: {1}]
  %s6 = inlined_call_operand.vmem [shape: f32[2,2,8,1], index: 6, kind: output, shape index: {2}]
  %s7 = inlined_call_operand.vmem [shape: f32[2,2,16,1], index: 7, kind: output, shape index: {3}]
  %8 = xla_tuple %s4, %s5, %s6, %s7
  %s9 = sld [smem:[#allocation0]]
  $region73: #{tpu_custom_call.1} parent=0
    _
  %s11 = ssub.s32 1, %s9
  %s12 = scalar_select 0, %s11, %s9
  $region1: #{tpu_custom_call.1} parent=0
    #allocation2 [shape = 'u8[8192]{0}', space=vmem, size = 0x2000, scoped, tag = 'output window, operand 0']
    #allocation3 [shape = 's32[2]{0}', space=sflag, size = 0x8, scoped, tag = 'scoped memory for tpu_custom_call.1']
    #allocation4 [shape = 'u8[1024]{0}', space=vmem, size = 0x400, scoped, tag = 'output window, operand 1']
    #allocation5 [shape = 's32[2]{0}', space=sflag, size = 0x8, scoped, tag = 'scoped memory for tpu_custom_call.1']
    %13 = vsyncpa [#allocation3], 0
    %s14 = scalar_lea.sflag [#allocation3], 1
    %15 = vsyncpa %s14, 0
    %16 = vsyncpa [#allocation5], 0
    %s17 = scalar_lea.sflag [#allocation5], 1
    %18 = vsyncpa %s17, 0
    loop: start=0, step=1, limit=6
    $region2: #{tpu_custom_call.1} parent=1 // loop_pre_header
      _
    $region3: #{tpu_custom_call.1} parent=1 // loop_header
      %s20 = sphi 0, %s24
      %p21 = scmp.ge.s32.totalorder %s20, 6
      %s27 = sphi 0, %s39
      %s28 = sphi 0, %s35
      %s29 = sphi 0, %s27
      %s30 = sphi 0, %s28
      %s31 = sphi 0, %s29
      %s32 = sphi 0, %s30
      %s44 = sphi 0, %s46
      %s47 = sphi 0, %s44
      %s48 = sphi 0, %s47
      %s64 = sphi 0, %s48
      %s68 = sphi 0, %s68
      %s70 = sphi 0, %s68
      %s71 = sphi 0, %s70
      %s85 = sphi 0, %s71
      %s89 = sphi 0, %s89
      %s91 = sphi 0, %s89
      %s92 = sphi 0, %s91
      %s106 = sphi 0, %s92
      %s110 = sphi 0, %s110
      %s112 = sphi 0, %s110
      %s113 = sphi 0, %s112
      %s127 = sphi 0, %s113
      %s135 = sphi 0, %s137
      %s138 = sphi 0, %s135
      %s139 = sphi 0, %s138
      %s155 = sphi 0, %s139
      %s163 = sphi 0, %s165
      %s166 = sphi 0, %s163
      %s167 = sphi 0, %s166
      %s183 = sphi 0, %s167
      %s191 = sphi 0, %s193
      %s194 = sphi 0, %s191
      %s195 = sphi 0, %s194
      %s211 = sphi 0, %s195
      %s219 = sphi 0, %s221
      %s222 = sphi 0, %s219
      %s223 = sphi 0, %s222
      %s239 = sphi 0, %s223
    $region4: #{tpu_custom_call.1} parent=1 // loop_header_branch
      %23 = sbr.rel (%p21) target = $region8
    $region5: #{tpu_custom_call.1} parent=1 // loop_body
      %s25 = ssub.s32 %s20, 1
      %s26 = ssub.s32 %s20, 2
      %s33 = sadd.s32 1, %s28
      %p34 = scmp.ge.s32.totalorder %s33, 2
      %s35 = scalar_select %p34, 0, %s33
      %s36 = sadd.s32 1, %s27
      %s37 = scalar_select %p34, %s36, %s27
      %p38 = scmp.ge.s32.totalorder %s37, 2
      %s39 = scalar_select %p38, 0, %s37
      %s40 = ssub.s32 %s27, %s39
      %s41 = ssub.s32 %s28, %s35
      %s42 = sor.u32 %s40, %s41
      %p43 = scmp.eq.s32.totalorder %s42, 0
      %s45 = sadd.s32 %s44, 1
      %s46 = scalar_select %p43, %s44, %s45
      %p49 = pneg %p43
      %p50 = scmp.eq.s32.totalorder %s20, 3
      %p51 = por %p49, %p50
      %p52 = scmp.ne.s32.totalorder %s44, %s47
      %p53 = scmp.eq.s32.totalorder %s20, 0
      %p54 = por %p52, %p53
      %p55 = scmp.ne.s32.totalorder %s44, %s47
      %p56 = scmp.eq.s32.totalorder %s25, 3
      %p57 = por %p55, %p56
      %p58 = scmp.ne.s32.totalorder %s47, %s48
      %p59 = scmp.eq.s32.totalorder %s25, 0
      %p60 = por %p58, %p59
      %p61 = scmp.ne.s32.totalorder %s47, %s48
      %p62 = scmp.eq.s32.totalorder %s26, 3
      %p63 = por %p61, %p62
      %p65 = scmp.ne.s32.totalorder %s48, %s64
      %p66 = scmp.eq.s32.totalorder %s26, 0
      %p67 = por %p65, %p66
      %s69 = sadd.s32 %s68, 1
      %p72 = scmp.eq.s32.totalorder %s20, 3
      %p73 = scmp.ne.s32.totalorder %s68, %s70
      %p74 = scmp.eq.s32.totalorder %s20, 0
      %p75 = por %p73, %p74
      %p76 = scmp.ne.s32.totalorder %s68, %s70
      %p77 = scmp.eq.s32.totalorder %s25, 3
      %p78 = por %p76, %p77
      %p79 = scmp.ne.s32.totalorder %s70, %s71
      %p80 = scmp.eq.s32.totalorder %s25, 0
      %p81 = por %p79, %p80
      %p82 = scmp.ne.s32.totalorder %s70, %s71
      %p83 = scmp.eq.s32.totalorder %s26, 3
      %p84 = por %p82, %p83
      %p86 = scmp.ne.s32.totalorder %s71, %s85
      %p87 = scmp.eq.s32.totalorder %s26, 0
      %p88 = por %p86, %p87
      %s90 = sadd.s32 %s89, 1
      %p93 = scmp.eq.s32.totalorder %s20, 3
      %p94 = scmp.ne.s32.totalorder %s89, %s91
      %p95 = scmp.eq.s32.totalorder %s20, 0
      %p96 = por %p94, %p95
      %p97 = scmp.ne.s32.totalorder %s89, %s91
      %p98 = scmp.eq.s32.totalorder %s25, 3
      %p99 = por %p97, %p98
      %p100 = scmp.ne.s32.totalorder %s91, %s92
      %p101 = scmp.eq.s32.totalorder %s25, 0
      %p102 = por %p100, %p101
      %p103 = scmp.ne.s32.totalorder %s91, %s92
      %p104 = scmp.eq.s32.totalorder %s26, 3
      %p105 = por %p103, %p104
      %p107 = scmp.ne.s32.totalorder %s92, %s106
      %p108 = scmp.eq.s32.totalorder %s26, 0
      %p109 = por %p107, %p108
      %s111 = sadd.s32 %s110, 1
      %p114 = scmp.eq.s32.totalorder %s20, 3
      %p115 = scmp.ne.s32.totalorder %s110, %s112
      %p116 = scmp.eq.s32.totalorder %s20, 0
      %p117 = por %p115, %p116
      %p118 = scmp.ne.s32.totalorder %s110, %s112
      %p119 = scmp.eq.s32.totalorder %s25, 3
      %p120 = por %p118, %p119
      %p121 = scmp.ne.s32.totalorder %s112, %s113
      %p122 = scmp.eq.s32.totalorder %s25, 0
      %p123 = por %p121, %p122
      %p124 = scmp.ne.s32.totalorder %s112, %s113
      %p125 = scmp.eq.s32.totalorder %s26, 3
      %p126 = por %p124, %p125
      %p128 = scmp.ne.s32.totalorder %s113, %s127
      %p129 = scmp.eq.s32.totalorder %s26, 0
      %p130 = por %p128, %p129
      %s131 = ssub.s32 %s27, %s39
      %s132 = ssub.s32 %s28, %s35
      %s133 = sor.u32 %s131, %s132
      %p134 = scmp.eq.s32.totalorder %s133, 0
      %s136 = sadd.s32 %s135, 1
      %s137 = scalar_select %p134, %s135, %s136
      %p140 = pneg %p134
      %p141 = scmp.eq.s32.totalorder %s20, 3
      %p142 = por %p140, %p141
      %p143 = scmp.ne.s32.totalorder %s135, %s138
      %p144 = scmp.eq.s32.totalorder %s20, 0
      %p145 = por %p143, %p144
      %p146 = scmp.ne.s32.totalorder %s135, %s138
      %p147 = scmp.eq.s32.totalorder %s25, 3
      %p148 = por %p146, %p147
      %p149 = scmp.ne.s32.totalorder %s138, %s139
      %p150 = scmp.eq.s32.totalorder %s25, 0
      %p151 = por %p149, %p150
      %p152 = scmp.ne.s32.totalorder %s138, %s139
      %p153 = scmp.eq.s32.totalorder %s26, 3
      %p154 = por %p152, %p153
      %p156 = scmp.ne.s32.totalorder %s139, %s155
      %p157 = scmp.eq.s32.totalorder %s26, 0
      %p158 = por %p156, %p157
      %s159 = ssub.s32 %s27, %s39
      %s160 = ssub.s32 %s28, %s35
      %s161 = sor.u32 %s159, %s160
      %p162 = scmp.eq.s32.totalorder %s161, 0
      %s164 = sadd.s32 %s163, 1
      %s165 = scalar_select %p162, %s163, %s164
      %p168 = pneg %p162
      %p169 = scmp.eq.s32.totalorder %s20, 3
      %p170 = por %p168, %p169
      %p171 = scmp.ne.s32.totalorder %s163, %s166
      %p172 = scmp.eq.s32.totalorder %s20, 0
      %p173 = por %p171, %p172
      %p174 = scmp.ne.s32.totalorder %s163, %s166
      %p175 = scmp.eq.s32.totalorder %s25, 3
      %p176 = por %p174, %p175
      %p177 = scmp.ne.s32.totalorder %s166, %s167
      %p178 = scmp.eq.s32.totalorder %s25, 0
      %p179 = por %p177, %p178
      %p180 = scmp.ne.s32.totalorder %s166, %s167
      %p181 = scmp.eq.s32.totalorder %s26, 3
      %p182 = por %p180, %p181
      %p184 = scmp.ne.s32.totalorder %s167, %s183
      %p185 = scmp.eq.s32.totalorder %s26, 0
      %p186 = por %p184, %p185
      %s187 = ssub.s32 %s27, %s39
      %s188 = ssub.s32 %s28, %s35
      %s189 = sor.u32 %s187, %s188
      %p190 = scmp.eq.s32.totalorder %s189, 0
      %s192 = sadd.s32 %s191, 1
      %s193 = scalar_select %p190, %s191, %s192
      %p196 = pneg %p190
      %p197 = scmp.eq.s32.totalorder %s20, 3
      %p198 = por %p196, %p197
      %p199 = scmp.ne.s32.totalorder %s191, %s194
      %p200 = scmp.eq.s32.totalorder %s20, 0
      %p201 = por %p199, %p200
      %p202 = scmp.ne.s32.totalorder %s191, %s194
      %p203 = scmp.eq.s32.totalorder %s25, 3
      %p204 = por %p202, %p203
      %p205 = scmp.ne.s32.totalorder %s194, %s195
      %p206 = scmp.eq.s32.totalorder %s25, 0
      %p207 = por %p205, %p206
      %p208 = scmp.ne.s32.totalorder %s194, %s195
      %p209 = scmp.eq.s32.totalorder %s26, 3
      %p210 = por %p208, %p209
      %p212 = scmp.ne.s32.totalorder %s195, %s211
      %p213 = scmp.eq.s32.totalorder %s26, 0
      %p214 = por %p212, %p213
      %s215 = ssub.s32 %s27, %s39
      %s216 = ssub.s32 %s28, %s35
      %s217 = sor.u32 %s215, %s216
      %p218 = scmp.eq.s32.totalorder %s217, 0
      %s220 = sadd.s32 %s219, 1
      %s221 = scalar_select %p218, %s219, %s220
      %p224 = pneg %p218
      %p225 = scmp.eq.s32.totalorder %s20, 3
      %p226 = por %p224, %p225
      %p227 = scmp.ne.s32.totalorder %s219, %s222
      %p228 = scmp.eq.s32.totalorder %s20, 0
      %p229 = por %p227, %p228
      %p230 = scmp.ne.s32.totalorder %s219, %s222
      %p231 = scmp.eq.s32.totalorder %s25, 3
      %p232 = por %p230, %p231
      %p233 = scmp.ne.s32.totalorder %s222, %s223
      %p234 = scmp.eq.s32.totalorder %s25, 0
      %p235 = por %p233, %p234
      %p236 = scmp.ne.s32.totalorder %s222, %s223
      %p237 = scmp.eq.s32.totalorder %s26, 3
      %p238 = por %p236, %p237
      %p240 = scmp.ne.s32.totalorder %s223, %s239
      %p241 = scmp.eq.s32.totalorder %s26, 0
      %p242 = por %p240, %p241
      %p243 = scmp.le.s32.totalorder 1, %s20
      %p244 = scmp.lt.s32.totalorder %s20, 5
      %p245 = pnand %p243, %p244
      %p246 = pneg %p245
      // Predicated region
      $region9: #{tpu_custom_call.1} parent=5 // pred_check
        _
      $region10: #{tpu_custom_call.1} parent=5 // pred_check_branch
        %248 = sbr.rel (%p245) target = $region12
      $region11: #{tpu_custom_call.1} parent=5 // pred_region
        %s249 = ssub.s32 %s20, 1
        // Predicated region
        $region13: #{tpu_custom_call.1} parent=11 // pred_check
          %p250 = pneg %p81
        $region14: #{tpu_custom_call.1} parent=11 // pred_check_branch
          %252 = sbr.rel (%p250) target = $region16
        $region15: #{tpu_custom_call.1} parent=11 // pred_region
          _
        $region16: #{tpu_custom_call.1} parent=11 // pred_fallthru
          _
        // Predicated region
        $region17: #{tpu_custom_call.1} parent=11 // pred_check
          %p253 = pneg %p102
        $region18: #{tpu_custom_call.1} parent=11 // pred_check_branch
          %255 = sbr.rel (%p253) target = $region20
        $region19: #{tpu_custom_call.1} parent=11 // pred_region
          _
        $region20: #{tpu_custom_call.1} parent=11 // pred_fallthru
          _
        // Predicated region
        $region21: #{tpu_custom_call.1} parent=11 // pred_check
          %p256 = pneg %p123
        $region22: #{tpu_custom_call.1} parent=11 // pred_check_branch
          %258 = sbr.rel (%p256) target = $region24
        $region23: #{tpu_custom_call.1} parent=11 // pred_region
          _
        $region24: #{tpu_custom_call.1} parent=11 // pred_fallthru
          _
      $region12: #{tpu_custom_call.1} parent=5 // pred_fallthru
        _
      %p259 = scmp.lt.s32.totalorder %s20, 4
      // Predicated region
      $region25: #{tpu_custom_call.1} parent=5 // pred_check
        %p260 = pneg %p259
      $region26: #{tpu_custom_call.1} parent=5 // pred_check_branch
        %262 = sbr.rel (%p260) target = $region28
      $region27: #{tpu_custom_call.1} parent=5 // pred_region
        // Predicated region
        $region29: #{tpu_custom_call.1} parent=27 // pred_check
          %p263 = pneg %p54
        $region30: #{tpu_custom_call.1} parent=27 // pred_check_branch
          %265 = sbr.rel (%p263) target = $region32
        $region31: #{tpu_custom_call.1} parent=27 // pred_region
          %p266 = scmp.lt.s32.totalorder %s27, 1
          %s267 = scalar_select %p266, %s27, 1
          %p268 = scmp.lt.s32.totalorder %s28, 1
          %s269 = scalar_select %p268, %s28, 1
          %s270 = smul.addr %s267, 2
          %s271 = sadd.s32 %s269, %s270
          %s272 = smul.addr %s271, 8
          %s273 = scalar_lea.vmem %s0, %s272
        $region32: #{tpu_custom_call.1} parent=27 // pred_fallthru
          _
      $region28: #{tpu_custom_call.1} parent=5 // pred_fallthru
        _
      %p274 = scmp.le.s32.totalorder 1, %s20
      %p275 = scmp.lt.s32.totalorder %s20, 5
      %p276 = pnand %p274, %p275
      %p277 = pneg %p276
      // Predicated region
      $region33: #{tpu_custom_call.1} parent=5 // pred_check
        _
      $region34: #{tpu_custom_call.1} parent=5 // pred_check_branch
        %279 = sbr.rel (%p276) target = $region36
      $region35: #{tpu_custom_call.1} parent=5 // pred_region
        %s280 = ssub.s32 %s20, 1
        %p281 = scmp.lt.s32.totalorder %s29, 1
        %s282 = scalar_select %p281, %s29, 1
        %p283 = scmp.lt.s32.totalorder %s30, 1
        %s284 = scalar_select %p283, %s30, 1
        %s285 = smul.addr %s282, 2
        %s286 = sadd.s32 %s284, %s285
        %s287 = smul.addr %s286, 8
        %s288 = scalar_lea.vmem %s0, %s287
        %p289 = pneg %p60
        %p290 = pneg %p57
        %p291 = pneg %p81
        %p292 = pneg %p78
        %p293 = pneg %p102
        %p294 = pneg %p99
        %p295 = pneg %p123
        %p296 = pneg %p120
        %p297 = pneg %p151
        %p298 = pneg %p148
        %s299 = sand.u32 %s138, 1
        %s300 = scalar_lea.sflag [#allocation3], %s299
        %s301 = sand.u32 %s138, 1
        %s302 = smul.addr %s301, 8
        %s303 = scalar_lea.vmem [#allocation2], %s302
        %p304 = pneg %p179
        %p305 = pneg %p176
        %s306 = sand.u32 %s166, 1
        %s307 = scalar_lea.sflag [#allocation5], %s306
        %s308 = sand.u32 %s166, 1
        %s309 = scalar_lea.vmem [#allocation4], %s308
        %p310 = pneg %p207
        %p311 = pneg %p204
        %p312 = scmp.lt.s32.totalorder %s29, 1
        %s313 = scalar_select %p312, %s29, 1
        %p314 = scmp.lt.s32.totalorder %s30, 1
        %s315 = scalar_select %p314, %s30, 1
        %s316 = smul.addr %s313, 2
        %s317 = sadd.s32 %s315, %s316
        %s318 = smul.addr %s317, 8
        %s319 = scalar_lea.vmem %s6, %s318
        %p320 = pneg %p235
        %p321 = pneg %p232
        %p322 = scmp.lt.s32.totalorder %s29, 1
        %s323 = scalar_select %p322, %s29, 1
        %p324 = scmp.lt.s32.totalorder %s30, 1
        %s325 = scalar_select %p324, %s30, 1
        %s326 = smul.addr %s325, 2
        %s327 = smul.addr %s323, 4
        %s328 = sadd.s32 %s326, %s327
        %s329 = smul.addr %s328, 8
        %s330 = scalar_lea.vmem %s7, %s329
        %p331 = scmp.lt.s32.totalorder %s29, 1
        %s332 = scalar_select %p331, %s29, 1
        %p333 = scmp.lt.s32.totalorder %s30, 1
        %s334 = scalar_select %p333, %s30, 1
        %s335 = smul.addr %s332, 2
        %s336 = sadd.s32 %s334, %s335
        %s337 = smul.addr %s336, 8
        %s338 = scalar_lea.vmem %s0, %s337
        %p339 = scmp.lt.s32.totalorder %s29, 1
        %s340 = scalar_select %p339, %s29, 1
        %p341 = scmp.lt.s32.totalorder %s30, 1
        %s342 = scalar_select %p341, %s30, 1
        %s343 = smul.addr %s340, 2
        %s344 = sadd.s32 %s342, %s343
        %s345 = smul.addr %s344, 8
        %s346 = scalar_lea.vmem %s6, %s345
        %p347 = scmp.lt.s32.totalorder %s29, 1
        %s348 = scalar_select %p347, %s29, 1
        %p349 = scmp.lt.s32.totalorder %s30, 1
        %s350 = scalar_select %p349, %s30, 1
        %s351 = smul.addr %s350, 2
        %s352 = smul.addr %s348, 4
        %s353 = sadd.s32 %s351, %s352
        %s354 = smul.addr %s353, 8
        %s355 = scalar_lea.vmem %s7, %s354
        %v356 = vld [vmem:[%s338] sm:$0xff]
        %v357 = vld [vmem:[%s1] sm:$0xff]
        %v358 = vld [vmem:[%s1 + $0x8] sm:$0xff]
        %v359 = vld [vmem:[%s2] sm:$0xff]
        %v360 = vld [vmem:[%s3] sm:$0xff]
        %v361 = vld [vmem:[%s3 + $0x8] sm:$0xff]
        %363 = vset.pattern.permute.xlu0 0
        %364 = vperm.xlu0 %363, %v360
        %v365 = vpop.permute.xlu0 %364
        %368 = vset.pattern.permute.xlu0 0
        %369 = vperm.xlu0 %368, %v361
        %v370 = vpop.permute.xlu0 %369
        %vm372 = vcmask 64512
        %v374 = vsel %vm372, %v357, 0
        %v377 = vsel %vm372, %v358, 0
        %379 = vmatprep.subr.mxu0 0.0
        %380 = vmatpush1.msra.mxu0 0.0
        %381 = vmatprep.subr.mxu0 0.0
        %382 = vmatpush1.msra.mxu0 0.0
        %383 = vmatprep.subr.mxu0 0.0
        %384 = vmatpush1.msra.mxu0 0.0
        %385 = vmatprep.subr.mxu0 0.0
        %386 = vmatpush1.msra.mxu0 0.0
        %387 = vmatprep.subr.mxu0 0.0
        %388 = vmatpush1.msra.mxu0 0.0
        %389 = vmatprep.subr.mxu0 0.0
        %390 = vmatpush1.msra.mxu0 0.0
        %391 = vmatprep.subr.mxu0 0.0
        %392 = vmatpush1.msra.mxu0 0.0
        %393 = vmatprep.subr.mxu0 0.0
        %394 = vmatpush1.msra.mxu0 0.0
        %395 = vmatprep.subr.mxu0 0.0
        %396 = vmatpush1.msra.mxu0 0.0
        %397 = vmatprep.subr.mxu0 0.0
        %398 = vmatpush1.msra.mxu0 0.0
        %399 = vmatprep.subr.mxu0 0.0
        %400 = vmatpush1.msra.mxu0 0.0
        %401 = vmatprep.subr.mxu0 0.0
        %402 = vmatpush1.msra.mxu0 0.0
        %403 = vmatprep.subr.mxu0 0.0
        %404 = vmatpush1.msra.mxu0 0.0
        %405 = vmatprep.subr.mxu0 0.0
        %406 = vmatpush1.msra.mxu0 0.0
        %407 = vmatprep.subr.mxu0 0.0
        %408 = vmatpush1.msra.mxu0 0.0
        %409 = vmatprep.subr.mxu0 0.0
        %410 = vmatpush1.msra.mxu0 %v356
        %411 = vmatprep.subr.mxu0 0.0
        %412 = vmatpush2.msra.mxu0 0.0
        %413 = vmatprep.subr.mxu0 0.0
        %414 = vmatpush2.msra.mxu0 0.0
        %415 = vmatprep.subr.mxu0 0.0
        %416 = vmatpush2.msra.mxu0 0.0
        %417 = vmatprep.subr.mxu0 0.0
        %418 = vmatpush2.msra.mxu0 0.0
        %419 = vmatprep.subr.mxu0 0.0
        %420 = vmatpush2.msra.mxu0 0.0
        %421 = vmatprep.subr.mxu0 0.0
        %422 = vmatpush2.msra.mxu0 0.0
        %423 = vmatprep.subr.mxu0 0.0
        %424 = vmatpush2.msra.mxu0 0.0
        %425 = vmatprep.subr.mxu0 0.0
        %426 = vmatpush2.msra.mxu0 0.0
        %427 = vmatprep.subr.mxu0 0.0
        %428 = vmatpush2.msra.mxu0 0.0
        %429 = vmatprep.subr.mxu0 0.0
        %430 = vmatpush2.msra.mxu0 0.0
        %431 = vmatprep.subr.mxu0 0.0
        %432 = vmatpush2.msra.mxu0 0.0
        %433 = vmatprep.subr.mxu0 0.0
        %434 = vmatpush2.msra.mxu0 0.0
        %435 = vmatprep.subr.mxu0 0.0
        %436 = vmatpush2.msra.mxu0 0.0
        %437 = vmatprep.subr.mxu0 0.0
        %438 = vmatpush2.msra.mxu0 0.0
        %439 = vmatprep.subr.mxu0 0.0
        %440 = vmatpush2.msra.mxu0 0.0
        %441 = vmatprep.subr.mxu0 0.0
        %442 = vmatpush2.msra.mxu0 0.0
        %443 = vmatprep.mubr.f32.mxu0 0.0
        %444 = vmatmul.mubr.f32.gmra.mxu0 %v374
        %v445 = vpop.f32.mrf.mxu0
        %v446 = vadd.f32 %v365, %v445
        %v447 = vpop.f32.mrf.mxu0
        %448 = vmatprep.mubr.f32.mxu0 0.0
        %449 = vmatmul.mubr.f32.gmra.mxu0 %v377
        %v450 = vpop.f32.mrf.mxu0
        %v451 = vadd.f32 %v370, %v450
        %v452 = vpop.f32.mrf.mxu0
        %453 = vdwg.mxu0
        %v454 = vmin.f32 %v446, %v451
        %v455 = vrot.slane %v454, 4
        %v456 = vmin.f32 %v454, %v455
        %v457 = vrot.slane %v456, 2
        %v458 = vmin.f32 %v456, %v457
        %v459 = vrot.slane %v458, 1
        %v460 = vmin.f32 %v458, %v459
        %v461 = vlaneseq
        %v462 = vshrl.u32 %v461, 7
        %v463 = vadd.s32 %v462, 8
        %vm464 = vcmp.le.f32.partialorder %v446, %v460
        %vm465 = vcmp.le.f32.partialorder %v451, %v460
        %v466 = vsel %vm464, %v462, 16
        %v467 = vsel %vm465, %v463, 16
        %vm468 = vcmp.lt.s32.totalorder %v466, %v467
        %v469 = vsel %vm468, %v466, %v467
        %v470 = vrot.slane %v469, 4
        %vm471 = vcmp.lt.s32.totalorder %v469, %v470
        %v472 = vsel %vm471, %v469, %v470
        %v473 = vrot.slane %v472, 2
        %vm474 = vcmp.lt.s32.totalorder %v472, %v473
        %v475 = vsel %vm474, %v472, %v473
        %v476 = vrot.slane %v475, 1
        %vm477 = vcmp.lt.s32.totalorder %v475, %v476
        %v478 = vsel %vm477, %v475, %v476
        %vm479 = vcmp.eq.s32.totalorder %v462, %v478
        %vm480 = vcmp.eq.s32.totalorder %v463, %v478
        %v481 = vsel %vm479, 1, 0
        %v482 = vsel %vm480, 1, 0
        %v483 = vcvt.s32.f32 %v481
        %v484 = vcvt.s32.f32 %v482
        %vm485 = vcmask 130048
        %v487 = vsel %vm485, %v359, 0
        %489 = vmatprep.subr.mxu0 0.0
        %490 = vmatpush1.msra.mxu0 0.0
        %491 = vmatprep.subr.mxu0 0.0
        %492 = vmatpush1.msra.mxu0 0.0
        %493 = vmatprep.subr.mxu0 0.0
        %494 = vmatpush1.msra.mxu0 0.0
        %495 = vmatprep.subr.mxu0 0.0
        %496 = vmatpush1.msra.mxu0 0.0
        %497 = vmatprep.subr.mxu0 0.0
        %498 = vmatpush1.msra.mxu0 0.0
        %499 = vmatprep.subr.mxu0 0.0
        %500 = vmatpush1.msra.mxu0 0.0
        %501 = vmatprep.subr.mxu0 0.0
        %502 = vmatpush1.msra.mxu0 0.0
        %503 = vmatprep.subr.mxu0 0.0
        %504 = vmatpush1.msra.mxu0 0.0
        %505 = vmatprep.subr.mxu0 0.0
        %506 = vmatpush1.msra.mxu0 0.0
        %507 = vmatprep.subr.mxu0 0.0
        %508 = vmatpush1.msra.mxu0 0.0
        %509 = vmatprep.subr.mxu0 0.0
        %510 = vmatpush1.msra.mxu0 0.0
        %511 = vmatprep.subr.mxu0 0.0
        %512 = vmatpush1.msra.mxu0 0.0
        %513 = vmatprep.subr.mxu0 0.0
        %514 = vmatpush1.msra.mxu0 0.0
        %515 = vmatprep.subr.mxu0 0.0
        %516 = vmatpush1.msra.mxu0 0.0
        %517 = vmatprep.subr.mxu0 0.0
        %518 = vmatpush1.msra.mxu0 %v484
        %519 = vmatprep.subr.mxu0 0.0
        %520 = vmatpush1.msra.mxu0 %v483
        %521 = vmatprep.subr.mxu0 0.0
        %522 = vmatpush2.msra.mxu0 0.0
        %523 = vmatprep.subr.mxu0 0.0
        %524 = vmatpush2.msra.mxu0 0.0
        %525 = vmatprep.subr.mxu0 0.0
        %526 = vmatpush2.msra.mxu0 0.0
        %527 = vmatprep.subr.mxu0 0.0
        %528 = vmatpush2.msra.mxu0 0.0
        %529 = vmatprep.subr.mxu0 0.0
        %530 = vmatpush2.msra.mxu0 0.0
        %531 = vmatprep.subr.mxu0 0.0
        %532 = vmatpush2.msra.mxu0 0.0
        %533 = vmatprep.subr.mxu0 0.0
        %534 = vmatpush2.msra.mxu0 0.0
        %535 = vmatprep.subr.mxu0 0.0
        %536 = vmatpush2.msra.mxu0 0.0
        %537 = vmatprep.subr.mxu0 0.0
        %538 = vmatpush2.msra.mxu0 0.0
        %539 = vmatprep.subr.mxu0 0.0
        %540 = vmatpush2.msra.mxu0 0.0
        %541 = vmatprep.subr.mxu0 0.0
        %542 = vmatpush2.msra.mxu0 0.0
        %543 = vmatprep.subr.mxu0 0.0
        %544 = vmatpush2.msra.mxu0 0.0
        %545 = vmatprep.subr.mxu0 0.0
        %546 = vmatpush2.msra.mxu0 0.0
        %547 = vmatprep.subr.mxu0 0.0
        %548 = vmatpush2.msra.mxu0 0.0
        %549 = vmatprep.subr.mxu0 0.0
        %550 = vmatpush2.msra.mxu0 0.0
        %551 = vmatprep.subr.mxu0 0.0
        %552 = vmatpush2.msra.mxu0 0.0
        %553 = vmatprep.mubr.f32.mxu0 0.0
        %554 = vmatmul.mubr.f32.gmra.mxu0 %v487
        %v555 = vpop.f32.mrf.mxu0
        %v556 = vadd.f32 0.0, %v555
        %v557 = vpop.f32.mrf.mxu0
        %558 = vdwg.mxu0
        %559 = vst [vmem:[%s303] sm:$0xff] %v556
        %560 = vst [vmem:[%s309] sm:$0x1] %v478
        %v561 = vsub.f32 %v556, %v356
        %v562 = vmul.f32 %v561, %v561
        %563 = vadd.xlane.f32.xlu0 %v562
        %v564 = vpop.xlane.xlu0 %563
        %vm565 = vcmask 7168
        %566 = vst.msk [vmem:[%s346] sm:$0xff] %vm565, %v564
        %567 = vadd.xlane.f32.xlu0 %v483
        %v568 = vpop.xlane.xlu0 %567
        %569 = vadd.xlane.f32.xlu0 %v484
        %v570 = vpop.xlane.xlu0 %569
        %571 = vst.msk [vmem:[%s355] sm:$0xff] %vm565, %v568
        %572 = vst.msk [vmem:[%s355 + $0x8] sm:$0xff] %vm565, %v570
        %s573 = sand.u32 %s138, 1
        %s574 = scalar_lea.sflag [#allocation3], %s573
        %s575 = sand.u32 %s138, 1
        %s576 = smul.addr %s575, 8
        %s577 = scalar_lea.vmem [#allocation2], %s576
        %s578 = sand.u32 %s166, 1
        %s579 = scalar_lea.sflag [#allocation5], %s578
        %s580 = sand.u32 %s166, 1
        %s581 = scalar_lea.vmem [#allocation4], %s580
        %p582 = scmp.lt.s32.totalorder %s29, 1
        %s583 = scalar_select %p582, %s29, 1
        %p584 = scmp.lt.s32.totalorder %s30, 1
        %s585 = scalar_select %p584, %s30, 1
        %s586 = smul.addr %s583, 2
        %s587 = sadd.s32 %s585, %s586
        %s588 = smul.addr %s587, 8
        %s589 = scalar_lea.vmem %s6, %s588
        %p590 = scmp.lt.s32.totalorder %s29, 1
        %s591 = scalar_select %p590, %s29, 1
        %p592 = scmp.lt.s32.totalorder %s30, 1
        %s593 = scalar_select %p592, %s30, 1
        %s594 = smul.addr %s593, 2
        %s595 = smul.addr %s591, 4
        %s596 = sadd.s32 %s594, %s595
        %s597 = smul.addr %s596, 8
        %s598 = scalar_lea.vmem %s7, %s597
        // Predicated region
        $region37: #{tpu_custom_call.1} parent=35 // pred_check
          %p599 = pneg %p148
        $region38: #{tpu_custom_call.1} parent=35 // pred_check_branch
          %601 = sbr.rel (%p599) target = $region40
        $region39: #{tpu_custom_call.1} parent=35 // pred_region
          %s603 = ssub.s32 128, 128
          %604 = vsyncadd %s574, %s603
          %s605 = smul.addr %s29, 2
          %s606 = sadd.s32 %s30, %s605
          %s607 = smul.addr %s606, 128
          %s608 = scalar_lea.hbm %s4, %s607
          %s610 = sshll.u32 %s577, 4
          %s611 = int_to_ptr.vmem [resolvable:$true] %s610
          %613 = dma.vmem_to_hbm [thread:$0]  %s611, 128, %s608, %s574
        $region40: #{tpu_custom_call.1} parent=35 // pred_fallthru
          _
        // Predicated region
        $region41: #{tpu_custom_call.1} parent=35 // pred_check
          %p614 = pneg %p176
        $region42: #{tpu_custom_call.1} parent=35 // pred_check_branch
          %616 = sbr.rel (%p614) target = $region44
        $region43: #{tpu_custom_call.1} parent=35 // pred_region
          %s618 = ssub.s32 16, 16
          %619 = vsyncadd %s579, %s618
          %s620 = smul.addr %s29, 2
          %s621 = sadd.s32 %s30, %s620
          %s622 = smul.addr %s621, 16
          %s623 = scalar_lea.hbm %s5, %s622
          %s625 = sshll.u32 %s581, 4
          %s626 = int_to_ptr.vmem [resolvable:$true] %s625
          %628 = dma.vmem_to_hbm [thread:$0]  %s626, 16, %s623, %s579
        $region44: #{tpu_custom_call.1} parent=35 // pred_fallthru
          _
        // Predicated region
        $region45: #{tpu_custom_call.1} parent=35 // pred_check
          %p629 = pneg %p204
        $region46: #{tpu_custom_call.1} parent=35 // pred_check_branch
          %631 = sbr.rel (%p629) target = $region48
        $region47: #{tpu_custom_call.1} parent=35 // pred_region
          _
        $region48: #{tpu_custom_call.1} parent=35 // pred_fallthru
          _
        // Predicated region
        $region49: #{tpu_custom_call.1} parent=35 // pred_check
          %p632 = pneg %p232
        $region50: #{tpu_custom_call.1} parent=35 // pred_check_branch
          %634 = sbr.rel (%p632) target = $region52
        $region51: #{tpu_custom_call.1} parent=35 // pred_region
          _
        $region52: #{tpu_custom_call.1} parent=35 // pred_fallthru
          _
      $region36: #{tpu_custom_call.1} parent=5 // pred_fallthru
        _
      %p635 = scmp.le.s32.totalorder 2, %s20
      // Predicated region
      $region53: #{tpu_custom_call.1} parent=5 // pred_check
        %p636 = pneg %p635
      $region54: #{tpu_custom_call.1} parent=5 // pred_check_branch
        %638 = sbr.rel (%p636) target = $region56
      $region55: #{tpu_custom_call.1} parent=5 // pred_region
        %s639 = ssub.s32 %s20, 2
        // Predicated region
        $region57: #{tpu_custom_call.1} parent=55 // pred_check
          %p640 = pneg %p154
        $region58: #{tpu_custom_call.1} parent=55 // pred_check_branch
          %642 = sbr.rel (%p640) target = $region60
        $region59: #{tpu_custom_call.1} parent=55 // pred_region
          %s643 = sand.u32 %s139, 1
          %s644 = scalar_lea.sflag [#allocation3], %s643
          %s645 = sand.u32 %s139, 1
          %s646 = smul.addr %s645, 8
          %s647 = scalar_lea.vmem [#allocation2], %s646
          %648 = dma.done %s644, 128
        $region60: #{tpu_custom_call.1} parent=55 // pred_fallthru
          _
        // Predicated region
        $region61: #{tpu_custom_call.1} parent=55 // pred_check
          %p649 = pneg %p182
        $region62: #{tpu_custom_call.1} parent=55 // pred_check_branch
          %651 = sbr.rel (%p649) target = $region64
        $region63: #{tpu_custom_call.1} parent=55 // pred_region
          %s652 = sand.u32 %s167, 1
          %s653 = scalar_lea.sflag [#allocation5], %s652
          %s654 = sand.u32 %s167, 1
          %s655 = scalar_lea.vmem [#allocation4], %s654
          %656 = dma.done %s653, 16
        $region64: #{tpu_custom_call.1} parent=55 // pred_fallthru
          _
        // Predicated region
        $region65: #{tpu_custom_call.1} parent=55 // pred_check
          %p657 = pneg %p210
        $region66: #{tpu_custom_call.1} parent=55 // pred_check_branch
          %659 = sbr.rel (%p657) target = $region68
        $region67: #{tpu_custom_call.1} parent=55 // pred_region
          %p660 = scmp.lt.s32.totalorder %s31, 1
          %s661 = scalar_select %p660, %s31, 1
          %p662 = scmp.lt.s32.totalorder %s32, 1
          %s663 = scalar_select %p662, %s32, 1
          %s664 = smul.addr %s661, 2
          %s665 = sadd.s32 %s663, %s664
          %s666 = smul.addr %s665, 8
          %s667 = scalar_lea.vmem %s6, %s666
        $region68: #{tpu_custom_call.1} parent=55 // pred_fallthru
          _
        // Predicated region
        $region69: #{tpu_custom_call.1} parent=55 // pred_check
          %p668 = pneg %p238
        $region70: #{tpu_custom_call.1} parent=55 // pred_check_branch
          %670 = sbr.rel (%p668) target = $region72
        $region71: #{tpu_custom_call.1} parent=55 // pred_region
          %p671 = scmp.lt.s32.totalorder %s31, 1
          %s672 = scalar_select %p671, %s31, 1
          %p673 = scmp.lt.s32.totalorder %s32, 1
          %s674 = scalar_select %p673, %s32, 1
          %s675 = smul.addr %s674, 2
          %s676 = smul.addr %s672, 4
          %s677 = sadd.s32 %s675, %s676
          %s678 = smul.addr %s677, 8
          %s679 = scalar_lea.vmem %s7, %s678
        $region72: #{tpu_custom_call.1} parent=55 // pred_fallthru
          _
      $region56: #{tpu_custom_call.1} parent=5 // pred_fallthru
        _
    $region6: #{tpu_custom_call.1} parent=1 // loop_footer
      %s24 = sadd.s32 1, %s20
    $region7: #{tpu_custom_call.1} parent=1 // loop_footer_branch
      %19 = sbr.rel target = $region3
    $region8: #{tpu_custom_call.1} parent=1 // loop_exit
      _
    %680 = vsyncpa [#allocation3], 1
    %s681 = scalar_lea.sflag [#allocation3], 1
    %682 = vsyncpa %s681, 1
    %683 = vsyncpa [#allocation5], 1
    %s684 = scalar_lea.sflag [#allocation5], 1
    %685 = vsyncpa %s684, 1

</llo_original>
